<compile_context>
chip_gen: v7x
topology: tpu7x:2x2x1
jax: 0.10.0
libtpu: 0.0.40
codegen_flags: <defaults>
</compile_context>

<pallas_src>
import jax
import jax.numpy as jnp
from jax import lax
from jax.experimental import pallas as pl
from jax.experimental.pallas import tpu as pltpu  # noqa: F401  (TPU backend)

EPS = 1e-5


def bn_relu_kernel(x_ref, gamma_ref, beta_ref, o_ref):
    # x_ref: (C, M) f32; gamma_ref/beta_ref: (C, 1) f32
    x = x_ref[...]
    # Per-channel batch statistics (training-mode BatchNorm: biased variance).
    mean = jnp.mean(x, axis=1, keepdims=True)                    # (C, 1)
    centered = x - mean
    var = jnp.mean(centered * centered, axis=1, keepdims=True)   # (C, 1)
    inv_std = lax.rsqrt(var + EPS)                               # (C, 1)
    # Fold gamma / inv_std / mean / beta into a single affine per channel:
    #   y = x * scale + shift  (cuts per-element VALU ops to mul+add+max).
    scale = gamma_ref[...] * inv_std                             # (C, 1)
    shift = beta_ref[...] - mean * scale                         # (C, 1)
    o_ref[...] = jnp.maximum(x * scale + shift, 0.0)             # ReLU


def batchnorm_relu(x_nchw, gamma, beta):
    """x_nchw: (N, C, H, W) f32; gamma/beta: (C,) f32. Returns (N, C, H, W)."""
    N, C, H, W = x_nchw.shape
    M = N * H * W

    if N == 1:
        # Free reshape: (1, C, H, W) -> (C, H*W), no transpose / data movement.
        x2d = x_nchw.reshape(C, M)
    else:
        # General-N fallback (needs one transpose); module under test has N=1.
        x2d = jnp.moveaxis(x_nchw, 1, 0).reshape(C, M)

    gamma2d = gamma.reshape(C, 1).astype(jnp.float32)
    beta2d = beta.reshape(C, 1).astype(jnp.float32)

    # Whole-array single block: ~1.1 MB total VMEM footprint, far below the
    # scoped default on v5e/v6e/v7x; tiling would only add per-step overhead.
    # NOTE(v7x): if M grows large (big N), raise vmem_limit_bytes via
    # pltpu.CompilerParams or switch to a gridded two-pass reduction.
    out2d = pl.pallas_call(
        bn_relu_kernel,
        out_shape=jax.ShapeDtypeStruct((C, M), jnp.float32),
        in_specs=[
            pl.BlockSpec((C, M), lambda: (0, 0)),
            pl.BlockSpec((C, 1), lambda: (0, 0)),
            pl.BlockSpec((C, 1), lambda: (0, 0)),
        ],
        out_specs=pl.BlockSpec((C, M), lambda: (0, 0)),
        input_output_aliases={0: 0},  # x2d is dead after the call; reuse its HBM buffer
    )(x2d, gamma2d, beta2d)

    if N == 1:
        return out2d.reshape(N, C, H, W)
    return jnp.moveaxis(out2d.reshape(C, N, H, W), 0, 1)


def _reference(x_nchw, gamma, beta):
    mean = jnp.mean(x_nchw, axis=(0, 2, 3), keepdims=True)
    var = jnp.mean((x_nchw - mean) ** 2, axis=(0, 2, 3), keepdims=True)
    y = (x_nchw - mean) * lax.rsqrt(var + EPS)
    y = y * gamma.reshape(1, -1, 1, 1) + beta.reshape(1, -1, 1, 1)
    return jnp.maximum(y, 0.0)


if __name__ == "__main__":
    key = jax.random.PRNGKey(0)
    kx, kg, kb = jax.random.split(key, 3)

    # Shape implied by the module: x52 = randn([1, 168, 28, 28]), NCHW.
    N, C, H, W = 1, 168, 28, 28
    x = jax.random.normal(kx, (N, C, H, W), dtype=jnp.float32)

    # BatchNorm2d(168, affine=True) parameters, deterministically initialized.
    gamma = 1.0 + 0.1 * jax.random.normal(kg, (C,), dtype=jnp.float32)
    beta = 0.1 * jax.random.normal(kb, (C,), dtype=jnp.float32)

    out = batchnorm_relu(x, gamma, beta)
    out = jax.block_until_ready(out)

    ref = jax.block_until_ready(_reference(x, gamma, beta))
    assert out.shape == (N, C, H, W)
    assert jnp.allclose(out, ref, atol=1e-4, rtol=1e-4)

    print("KERNEL_OK")
</pallas_src>

<mosaic_0001>
module attributes {stable_mosaic.version = 11 : i64} {
  func.func @bn_relu_kernel(%arg0: memref<168x784xf32, #tpu.memory_space<vmem>>, %arg1: memref<168x1xf32, #tpu.memory_space<vmem>>, %arg2: memref<168x1xf32, #tpu.memory_space<vmem>>, %arg3: memref<168x784xf32, #tpu.memory_space<vmem>>) attributes {dimension_semantics = [], scalar_prefetch = 0 : i64, scratch_operands = 0 : i64, tpu.core_type = #tpu.core_type<tc>} {
    %c0 = arith.constant 0 : index
    %c0_0 = arith.constant 0 : index
    %0 = vector.load %arg0[%c0, %c0_0] : memref<168x784xf32, #tpu.memory_space<vmem>>, vector<168x784xf32>
    %cst = arith.constant dense<0.000000e+00> : vector<168xf32>
    %1 = vector.multi_reduction <add>, %0, %cst [1] : vector<168x784xf32> to vector<168xf32>
    %2 = vector.shape_cast %1 : vector<168xf32> to vector<168x1xf32>
    %cst_1 = arith.constant 7.840000e+02 : f32
    %3 = vector.broadcast %cst_1 : f32 to vector<168x1xf32>
    %4 = arith.divf %2, %3 : vector<168x1xf32>
    %5 = vector.broadcast %4 : vector<168x1xf32> to vector<168x784xf32>
    %6 = arith.subf %0, %5 : vector<168x784xf32>
    %7 = arith.mulf %6, %6 : vector<168x784xf32>
    %cst_2 = arith.constant dense<0.000000e+00> : vector<168xf32>
    %8 = vector.multi_reduction <add>, %7, %cst_2 [1] : vector<168x784xf32> to vector<168xf32>
    %9 = vector.shape_cast %8 : vector<168xf32> to vector<168x1xf32>
    %cst_3 = arith.constant 7.840000e+02 : f32
    %10 = vector.broadcast %cst_3 : f32 to vector<168x1xf32>
    %11 = arith.divf %9, %10 : vector<168x1xf32>
    %cst_4 = arith.constant 9.99999974E-6 : f32
    %12 = vector.broadcast %cst_4 : f32 to vector<168x1xf32>
    %13 = arith.addf %11, %12 : vector<168x1xf32>
    %14 = math.rsqrt %13 : vector<168x1xf32>
    %c0_5 = arith.constant 0 : index
    %c0_6 = arith.constant 0 : index
    %15 = vector.load %arg1[%c0_5, %c0_6] : memref<168x1xf32, #tpu.memory_space<vmem>>, vector<168x1xf32>
    %16 = arith.mulf %15, %14 : vector<168x1xf32>
    %c0_7 = arith.constant 0 : index
    %c0_8 = arith.constant 0 : index
    %17 = vector.load %arg2[%c0_7, %c0_8] : memref<168x1xf32, #tpu.memory_space<vmem>>, vector<168x1xf32>
    %18 = arith.mulf %4, %16 : vector<168x1xf32>
    %19 = arith.subf %17, %18 : vector<168x1xf32>
    %20 = vector.broadcast %16 : vector<168x1xf32> to vector<168x784xf32>
    %21 = arith.mulf %0, %20 : vector<168x784xf32>
    %22 = vector.broadcast %19 : vector<168x1xf32> to vector<168x784xf32>
    %23 = arith.addf %21, %22 : vector<168x784xf32>
    %cst_9 = arith.constant 0.000000e+00 : f32
    %24 = vector.broadcast %cst_9 : f32 to vector<168x784xf32>
    %25 = arith.maximumf %23, %24 : vector<168x784xf32>
    %c0_10 = arith.constant 0 : index
    %c0_11 = arith.constant 0 : index
    %26 = vector.load %arg3[%c0_10, %c0_11] : memref<168x784xf32, #tpu.memory_space<vmem>>, vector<168x784xf32>
    tpu.vector_store %arg3[%c0_10, %c0_11], %25 {strides = array<i32>} : memref<168x784xf32, #tpu.memory_space<vmem>>, vector<168x784xf32>,
    return
  }
}

</mosaic_0001>

<llo_original>
// kernel: tpu_custom_call.1
$region0: #{tpu_custom_call.1}
  #allocation0 [shape = 'u32[]', space=smem, size = 0x4, offset = 0x4, fixed_abs, tag = 'smem constant byte address 0x4 - core index']
  #allocation1 [shape = 'u32[144,128]{1,0:T(1,128)}', space=vmem, size = 0x12000, scoped, tag = 'internal scratch']
  %s0 = inlined_call_operand.hbm [shape: f32[168,784], index: 0, kind: input, shape index: {}, may-alias: {0,3}]
  %s1 = inlined_call_operand.vmem [shape: f32[168,1], index: 1, kind: input, shape index: {}]
  %s2 = inlined_call_operand.vmem [shape: f32[168,1], index: 2, kind: input, shape index: {}]
  %s3 = inlined_call_operand.hbm [shape: f32[168,784], index: 3, kind: output, shape index: {}, may-alias: {0,3}]
  %s4 = sld [smem:[#allocation0]]
  $region26: #{tpu_custom_call.1} parent=0
    _
  %s6 = ssub.s32 1, %s4
  %s7 = scalar_select 0, %s6, %s4
  $region1: #{tpu_custom_call.1} parent=0
    #allocation2 [shape = 'u8[602112]{0}', space=vmem, size = 0x93000, scoped, tag = 'input window, operand 0, single buffered']
    #allocation3 [shape = 's32[1]{0}', space=sflag, size = 0x4, scoped, tag = 'scoped memory for tpu_custom_call.1']
    #allocation4 [shape = 's32[1]{0}', space=sflag, size = 0x4, scoped, tag = 'scoped memory for tpu_custom_call.1']
    #allocation5 [shape = 'u8[602112]{0}', space=vmem, size = 0x93000, scoped, tag = 'output window, operand 0, single buffered']
    %8 = vsyncpa [#allocation3], 0
    %9 = vsyncpa [#allocation4], 0
    // Predicated region
    $region2: #{tpu_custom_call.1} parent=1 // pred_check
      _
    $region3: #{tpu_custom_call.1} parent=1 // pred_check_branch
      %11 = sbr.rel (0) target = $region5
    $region4: #{tpu_custom_call.1} parent=1 // pred_region
      %s13 = ssub.s32 18816, 18816
      %14 = vsyncadd [#allocation3], %s13
      %s15 = sshll.u32 [#allocation2], 4
      %s16 = int_to_ptr.vmem [resolvable:$true] %s15
      %21 = dma.hbm_to_vmem [thread:$0]  %s0, 18816, %s16, [#allocation3], 896, 896, 56
    $region5: #{tpu_custom_call.1} parent=1 // pred_fallthru
      _
    // Predicated region
    $region6: #{tpu_custom_call.1} parent=1 // pred_check
      _
    $region7: #{tpu_custom_call.1} parent=1 // pred_check_branch
      %23 = sbr.rel (0) target = $region9
    $region8: #{tpu_custom_call.1} parent=1 // pred_region
      _
    $region9: #{tpu_custom_call.1} parent=1 // pred_fallthru
      _
    // Predicated region
    $region10: #{tpu_custom_call.1} parent=1 // pred_check
      _
    $region11: #{tpu_custom_call.1} parent=1 // pred_check_branch
      %25 = sbr.rel (0) target = $region13
    $region12: #{tpu_custom_call.1} parent=1 // pred_region
      _
    $region13: #{tpu_custom_call.1} parent=1 // pred_fallthru
      _
    // Predicated region
    $region14: #{tpu_custom_call.1} parent=1 // pred_check
      _
    $region15: #{tpu_custom_call.1} parent=1 // pred_check_branch
      %27 = sbr.rel (0) target = $region17
    $region16: #{tpu_custom_call.1} parent=1 // pred_region
      %28 = dma.done [#allocation3], 18816
    $region17: #{tpu_custom_call.1} parent=1 // pred_fallthru
      _
    %v29 = vld [vmem:[#allocation2] sm:$0xff]
    %v30 = vld [vmem:[#allocation2 + $0x8] sm:$0xff]
    %v31 = vld [vmem:[#allocation2 + $0x10] sm:$0xff]
    %v32 = vld [vmem:[#allocation2 + $0x18] sm:$0xff]
    %v33 = vld [vmem:[#allocation2 + $0x20] sm:$0xff]
    %v34 = vld [vmem:[#allocation2 + $0x28] sm:$0xff]
    %v35 = vld [vmem:[#allocation2 + $0x30] sm:$0xff]
    %v36 = vld [vmem:[#allocation2 + $0x38] sm:$0xff]
    %v37 = vld [vmem:[#allocation2 + $0x40] sm:$0xff]
    %v38 = vld [vmem:[#allocation2 + $0x48] sm:$0xff]
    %v39 = vld [vmem:[#allocation2 + $0x50] sm:$0xff]
    %v40 = vld [vmem:[#allocation2 + $0x58] sm:$0xff]
    %v41 = vld [vmem:[#allocation2 + $0x60] sm:$0xff]
    %v42 = vld [vmem:[#allocation2 + $0x68] sm:$0xff]
    %v43 = vld [vmem:[#allocation2 + $0x70] sm:$0xff]
    %v44 = vld [vmem:[#allocation2 + $0x78] sm:$0xff]
    %v45 = vld [vmem:[#allocation2 + $0x80] sm:$0xff]
    %v46 = vld [vmem:[#allocation2 + $0x88] sm:$0xff]
    %v47 = vld [vmem:[#allocation2 + $0x90] sm:$0xff]
    %v48 = vld [vmem:[#allocation2 + $0x98] sm:$0xff]
    %v49 = vld [vmem:[#allocation2 + $0xa0] sm:$0xff]
    %v50 = vld [vmem:[#allocation2 + $0xa8] sm:$0xff]
    %v51 = vld [vmem:[#allocation2 + $0xb0] sm:$0xff]
    %v52 = vld [vmem:[#allocation2 + $0xb8] sm:$0xff]
    %v53 = vld [vmem:[#allocation2 + $0xc0] sm:$0xff]
    %v54 = vld [vmem:[#allocation2 + $0xc8] sm:$0xff]
    %v55 = vld [vmem:[#allocation2 + $0xd0] sm:$0xff]
    %v56 = vld [vmem:[#allocation2 + $0xd8] sm:$0xff]
    %v57 = vld [vmem:[#allocation2 + $0xe0] sm:$0xff]
    %v58 = vld [vmem:[#allocation2 + $0xe8] sm:$0xff]
    %v59 = vld [vmem:[#allocation2 + $0xf0] sm:$0xff]
    %v60 = vld [vmem:[#allocation2 + $0xf8] sm:$0xff]
    %v61 = vld [vmem:[#allocation2 + $0x100] sm:$0xff]
    %v62 = vld [vmem:[#allocation2 + $0x108] sm:$0xff]
    %v63 = vld [vmem:[#allocation2 + $0x110] sm:$0xff]
    %v64 = vld [vmem:[#allocation2 + $0x118] sm:$0xff]
    %v65 = vld [vmem:[#allocation2 + $0x120] sm:$0xff]
    %v66 = vld [vmem:[#allocation2 + $0x128] sm:$0xff]
    %v67 = vld [vmem:[#allocation2 + $0x130] sm:$0xff]
    %v68 = vld [vmem:[#allocation2 + $0x138] sm:$0xff]
    %v69 = vld [vmem:[#allocation2 + $0x140] sm:$0xff]
    %v70 = vld [vmem:[#allocation2 + $0x148] sm:$0xff]
    %v71 = vld [vmem:[#allocation2 + $0x150] sm:$0xff]
    %v72 = vld [vmem:[#allocation2 + $0x158] sm:$0xff]
    %v73 = vld [vmem:[#allocation2 + $0x160] sm:$0xff]
    %v74 = vld [vmem:[#allocation2 + $0x168] sm:$0xff]
    %v75 = vld [vmem:[#allocation2 + $0x170] sm:$0xff]
    %v76 = vld [vmem:[#allocation2 + $0x178] sm:$0xff]
    %v77 = vld [vmem:[#allocation2 + $0x180] sm:$0xff]
    %v78 = vld [vmem:[#allocation2 + $0x188] sm:$0xff]
    %v79 = vld [vmem:[#allocation2 + $0x190] sm:$0xff]
    %v80 = vld [vmem:[#allocation2 + $0x198] sm:$0xff]
    %v81 = vld [vmem:[#allocation2 + $0x1a0] sm:$0xff]
    %v82 = vld [vmem:[#allocation2 + $0x1a8] sm:$0xff]
    %v83 = vld [vmem:[#allocation2 + $0x1b0] sm:$0xff]
    %v84 = vld [vmem:[#allocation2 + $0x1b8] sm:$0xff]
    %v85 = vld [vmem:[#allocation2 + $0x1c0] sm:$0xff]
    %v86 = vld [vmem:[#allocation2 + $0x1c8] sm:$0xff]
    %v87 = vld [vmem:[#allocation2 + $0x1d0] sm:$0xff]
    %v88 = vld [vmem:[#allocation2 + $0x1d8] sm:$0xff]
    %v89 = vld [vmem:[#allocation2 + $0x1e0] sm:$0xff]
    %v90 = vld [vmem:[#allocation2 + $0x1e8] sm:$0xff]
    %v91 = vld [vmem:[#allocation2 + $0x1f0] sm:$0xff]
    %v92 = vld [vmem:[#allocation2 + $0x1f8] sm:$0xff]
    %v93 = vld [vmem:[#allocation2 + $0x200] sm:$0xff]
    %v94 = vld [vmem:[#allocation2 + $0x208] sm:$0xff]
    %v95 = vld [vmem:[#allocation2 + $0x210] sm:$0xff]
    %v96 = vld [vmem:[#allocation2 + $0x218] sm:$0xff]
    %v97 = vld [vmem:[#allocation2 + $0x220] sm:$0xff]
    %v98 = vld [vmem:[#allocation2 + $0x228] sm:$0xff]
    %v99 = vld [vmem:[#allocation2 + $0x230] sm:$0xff]
    %v100 = vld [vmem:[#allocation2 + $0x238] sm:$0xff]
    %v101 = vld [vmem:[#allocation2 + $0x240] sm:$0xff]
    %v102 = vld [vmem:[#allocation2 + $0x248] sm:$0xff]
    %v103 = vld [vmem:[#allocation2 + $0x250] sm:$0xff]
    %v104 = vld [vmem:[#allocation2 + $0x258] sm:$0xff]
    %v105 = vld [vmem:[#allocation2 + $0x260] sm:$0xff]
    %v106 = vld [vmem:[#allocation2 + $0x268] sm:$0xff]
    %v107 = vld [vmem:[#allocation2 + $0x270] sm:$0xff]
    %v108 = vld [vmem:[#allocation2 + $0x278] sm:$0xff]
    %v109 = vld [vmem:[#allocation2 + $0x280] sm:$0xff]
    %v110 = vld [vmem:[#allocation2 + $0x288] sm:$0xff]
    %v111 = vld [vmem:[#allocation2 + $0x290] sm:$0xff]
    %v112 = vld [vmem:[#allocation2 + $0x298] sm:$0xff]
    %v113 = vld [vmem:[#allocation2 + $0x2a0] sm:$0xff]
    %v114 = vld [vmem:[#allocation2 + $0x2a8] sm:$0xff]
    %v115 = vld [vmem:[#allocation2 + $0x2b0] sm:$0xff]
    %v116 = vld [vmem:[#allocation2 + $0x2b8] sm:$0xff]
    %v117 = vld [vmem:[#allocation2 + $0x2c0] sm:$0xff]
    %v118 = vld [vmem:[#allocation2 + $0x2c8] sm:$0xff]
    %v119 = vld [vmem:[#allocation2 + $0x2d0] sm:$0xff]
    %v120 = vld [vmem:[#allocation2 + $0x2d8] sm:$0xff]
    %v121 = vld [vmem:[#allocation2 + $0x2e0] sm:$0xff]
    %v122 = vld [vmem:[#allocation2 + $0x2e8] sm:$0xff]
    %v123 = vld [vmem:[#allocation2 + $0x2f0] sm:$0xff]
    %v124 = vld [vmem:[#allocation2 + $0x2f8] sm:$0xff]
    %v125 = vld [vmem:[#allocation2 + $0x300] sm:$0xff]
    %v126 = vld [vmem:[#allocation2 + $0x308] sm:$0xff]
    %v127 = vld [vmem:[#allocation2 + $0x310] sm:$0xff]
    %v128 = vld [vmem:[#allocation2 + $0x318] sm:$0xff]
    %v129 = vld [vmem:[#allocation2 + $0x320] sm:$0xff]
    %v130 = vld [vmem:[#allocation2 + $0x328] sm:$0xff]
    %v131 = vld [vmem:[#allocation2 + $0x330] sm:$0xff]
    %v132 = vld [vmem:[#allocation2 + $0x338] sm:$0xff]
    %v133 = vld [vmem:[#allocation2 + $0x340] sm:$0xff]
    %v134 = vld [vmem:[#allocation2 + $0x348] sm:$0xff]
    %v135 = vld [vmem:[#allocation2 + $0x350] sm:$0xff]
    %v136 = vld [vmem:[#allocation2 + $0x358] sm:$0xff]
    %v137 = vld [vmem:[#allocation2 + $0x360] sm:$0xff]
    %v138 = vld [vmem:[#allocation2 + $0x368] sm:$0xff]
    %v139 = vld [vmem:[#allocation2 + $0x370] sm:$0xff]
    %v140 = vld [vmem:[#allocation2 + $0x378] sm:$0xff]
    %v141 = vld [vmem:[#allocation2 + $0x380] sm:$0xff]
    %v142 = vld [vmem:[#allocation2 + $0x388] sm:$0xff]
    %v143 = vld [vmem:[#allocation2 + $0x390] sm:$0xff]
    %v144 = vld [vmem:[#allocation2 + $0x398] sm:$0xff]
    %v145 = vld [vmem:[#allocation2 + $0x3a0] sm:$0xff]
    %v146 = vld [vmem:[#allocation2 + $0x3a8] sm:$0xff]
    %v147 = vld [vmem:[#allocation2 + $0x3b0] sm:$0xff]
    %v148 = vld [vmem:[#allocation2 + $0x3b8] sm:$0xff]
    %v149 = vld [vmem:[#allocation2 + $0x3c0] sm:$0xff]
    %v150 = vld [vmem:[#allocation2 + $0x3c8] sm:$0xff]
    %v151 = vld [vmem:[#allocation2 + $0x3d0] sm:$0xff]
    %v152 = vld [vmem:[#allocation2 + $0x3d8] sm:$0xff]
    %v153 = vld [vmem:[#allocation2 + $0x3e0] sm:$0xff]
    %v154 = vld [vmem:[#allocation2 + $0x3e8] sm:$0xff]
    %v155 = vld [vmem:[#allocation2 + $0x3f0] sm:$0xff]
    %v156 = vld [vmem:[#allocation2 + $0x3f8] sm:$0xff]
    %v157 = vld [vmem:[#allocation2 + $0x400] sm:$0xff]
    %v158 = vld [vmem:[#allocation2 + $0x408] sm:$0xff]
    %v159 = vld [vmem:[#allocation2 + $0x410] sm:$0xff]
    %v160 = vld [vmem:[#allocation2 + $0x418] sm:$0xff]
    %v161 = vld [vmem:[#allocation2 + $0x420] sm:$0xff]
    %v162 = vld [vmem:[#allocation2 + $0x428] sm:$0xff]
    %v163 = vld [vmem:[#allocation2 + $0x430] sm:$0xff]
    %v164 = vld [vmem:[#allocation2 + $0x438] sm:$0xff]
    %v165 = vld [vmem:[#allocation2 + $0x440] sm:$0xff]
    %v166 = vld [vmem:[#allocation2 + $0x448] sm:$0xff]
    %v167 = vld [vmem:[#allocation2 + $0x450] sm:$0xff]
    %v168 = vld [vmem:[#allocation2 + $0x458] sm:$0xff]
    %v169 = vld [vmem:[#allocation2 + $0x460] sm:$0xff]
    %v170 = vld [vmem:[#allocation2 + $0x468] sm:$0xff]
    %v171 = vld [vmem:[#allocation2 + $0x470] sm:$0xff]
    %v172 = vld [vmem:[#allocation2 + $0x478] sm:$0xff]
    %v173 = vld [vmem:[#allocation2 + $0x480] sm:$0xff]
    %v174 = vld [vmem:[#allocation2 + $0x488] sm:$0xff]
    %v175 = vld [vmem:[#allocation2 + $0x490] sm:$0xff]
    %v176 = vadd.f32 %v29, %v30
    %v177 = vadd.f32 %v176, %v31
    %v178 = vadd.f32 %v177, %v32
    %v179 = vadd.f32 %v178, %v33
    %v180 = vadd.f32 %v179, %v34
    %vm181 = vcmask 130048
    %v182 = vsel %vm181, %v35, 0.0
    %v183 = vadd.f32 %v180, %v182
    %184 = vadd.xlane.f32.xlu0 %v183
    %v185 = vpop.xlane.xlu0 %184
    %v186 = vadd.f32 %v36, %v37
    %v187 = vadd.f32 %v186, %v38
    %v188 = vadd.f32 %v187, %v39
    %v189 = vadd.f32 %v188, %v40
    %v190 = vadd.f32 %v189, %v41
    %v191 = vsel %vm181, %v42, 0.0
    %v192 = vadd.f32 %v190, %v191
    %193 = vadd.xlane.f32.xlu0 %v192
    %v194 = vpop.xlane.xlu0 %193
    %v195 = vadd.f32 %v43, %v44
    %v196 = vadd.f32 %v195, %v45
    %v197 = vadd.f32 %v196, %v46
    %v198 = vadd.f32 %v197, %v47
    %v199 = vadd.f32 %v198, %v48
    %v200 = vsel %vm181, %v49, 0.0
    %v201 = vadd.f32 %v199, %v200
    %202 = vadd.xlane.f32.xlu0 %v201
    %v203 = vpop.xlane.xlu0 %202
    %v204 = vadd.f32 %v50, %v51
    %v205 = vadd.f32 %v204, %v52
    %v206 = vadd.f32 %v205, %v53
    %v207 = vadd.f32 %v206, %v54
    %v208 = vadd.f32 %v207, %v55
    %v209 = vsel %vm181, %v56, 0.0
    %v210 = vadd.f32 %v208, %v209
    %211 = vadd.xlane.f32.xlu0 %v210
    %v212 = vpop.xlane.xlu0 %211
    %v213 = vadd.f32 %v57, %v58
    %v214 = vadd.f32 %v213, %v59
    %v215 = vadd.f32 %v214, %v60
    %v216 = vadd.f32 %v215, %v61
    %v217 = vadd.f32 %v216, %v62
    %v218 = vsel %vm181, %v63, 0.0
    %v219 = vadd.f32 %v217, %v218
    %220 = vadd.xlane.f32.xlu0 %v219
    %v221 = vpop.xlane.xlu0 %220
    %v222 = vadd.f32 %v64, %v65
    %v223 = vadd.f32 %v222, %v66
    %v224 = vadd.f32 %v223, %v67
    %v225 = vadd.f32 %v224, %v68
    %v226 = vadd.f32 %v225, %v69
    %v227 = vsel %vm181, %v70, 0.0
    %v228 = vadd.f32 %v226, %v227
    %229 = vadd.xlane.f32.xlu0 %v228
    %v230 = vpop.xlane.xlu0 %229
    %v231 = vadd.f32 %v71, %v72
    %v232 = vadd.f32 %v231, %v73
    %v233 = vadd.f32 %v232, %v74
    %v234 = vadd.f32 %v233, %v75
    %v235 = vadd.f32 %v234, %v76
    %v236 = vsel %vm181, %v77, 0.0
    %v237 = vadd.f32 %v235, %v236
    %238 = vadd.xlane.f32.xlu0 %v237
    %v239 = vpop.xlane.xlu0 %238
    %v240 = vadd.f32 %v78, %v79
    %v241 = vadd.f32 %v240, %v80
    %v242 = vadd.f32 %v241, %v81
    %v243 = vadd.f32 %v242, %v82
    %v244 = vadd.f32 %v243, %v83
    %v245 = vsel %vm181, %v84, 0.0
    %v246 = vadd.f32 %v244, %v245
    %247 = vadd.xlane.f32.xlu0 %v246
    %v248 = vpop.xlane.xlu0 %247
    %v249 = vadd.f32 %v85, %v86
    %v250 = vadd.f32 %v249, %v87
    %v251 = vadd.f32 %v250, %v88
    %v252 = vadd.f32 %v251, %v89
    %v253 = vadd.f32 %v252, %v90
    %v254 = vsel %vm181, %v91, 0.0
    %v255 = vadd.f32 %v253, %v254
    %256 = vadd.xlane.f32.xlu0 %v255
    %v257 = vpop.xlane.xlu0 %256
    %v258 = vadd.f32 %v92, %v93
    %v259 = vadd.f32 %v258, %v94
    %v260 = vadd.f32 %v259, %v95
    %v261 = vadd.f32 %v260, %v96
    %v262 = vadd.f32 %v261, %v97
    %v263 = vsel %vm181, %v98, 0.0
    %v264 = vadd.f32 %v262, %v263
    %265 = vadd.xlane.f32.xlu0 %v264
    %v266 = vpop.xlane.xlu0 %265
    %v267 = vadd.f32 %v99, %v100
    %v268 = vadd.f32 %v267, %v101
    %v269 = vadd.f32 %v268, %v102
    %v270 = vadd.f32 %v269, %v103
    %v271 = vadd.f32 %v270, %v104
    %v272 = vsel %vm181, %v105, 0.0
    %v273 = vadd.f32 %v271, %v272
    %274 = vadd.xlane.f32.xlu0 %v273
    %v275 = vpop.xlane.xlu0 %274
    %v276 = vadd.f32 %v106, %v107
    %v277 = vadd.f32 %v276, %v108
    %v278 = vadd.f32 %v277, %v109
    %v279 = vadd.f32 %v278, %v110
    %v280 = vadd.f32 %v279, %v111
    %v281 = vsel %vm181, %v112, 0.0
    %v282 = vadd.f32 %v280, %v281
    %283 = vadd.xlane.f32.xlu0 %v282
    %v284 = vpop.xlane.xlu0 %283
    %v285 = vadd.f32 %v113, %v114
    %v286 = vadd.f32 %v285, %v115
    %v287 = vadd.f32 %v286, %v116
    %v288 = vadd.f32 %v287, %v117
    %v289 = vadd.f32 %v288, %v118
    %v290 = vsel %vm181, %v119, 0.0
    %v291 = vadd.f32 %v289, %v290
    %292 = vadd.xlane.f32.xlu0 %v291
    %v293 = vpop.xlane.xlu0 %292
    %v294 = vadd.f32 %v120, %v121
    %v295 = vadd.f32 %v294, %v122
    %v296 = vadd.f32 %v295, %v123
    %v297 = vadd.f32 %v296, %v124
    %v298 = vadd.f32 %v297, %v125
    %v299 = vsel %vm181, %v126, 0.0
    %v300 = vadd.f32 %v298, %v299
    %301 = vadd.xlane.f32.xlu0 %v300
    %v302 = vpop.xlane.xlu0 %301
    %v303 = vadd.f32 %v127, %v128
    %v304 = vadd.f32 %v303, %v129
    %v305 = vadd.f32 %v304, %v130
    %v306 = vadd.f32 %v305, %v131
    %v307 = vadd.f32 %v306, %v132
    %v308 = vsel %vm181, %v133, 0.0
    %v309 = vadd.f32 %v307, %v308
    %310 = vadd.xlane.f32.xlu0 %v309
    %v311 = vpop.xlane.xlu0 %310
    %v312 = vadd.f32 %v134, %v135
    %v313 = vadd.f32 %v312, %v136
    %v314 = vadd.f32 %v313, %v137
    %v315 = vadd.f32 %v314, %v138
    %v316 = vadd.f32 %v315, %v139
    %v317 = vsel %vm181, %v140, 0.0
    %v318 = vadd.f32 %v316, %v317
    %319 = vadd.xlane.f32.xlu0 %v318
    %v320 = vpop.xlane.xlu0 %319
    %v321 = vadd.f32 %v141, %v142
    %v322 = vadd.f32 %v321, %v143
    %v323 = vadd.f32 %v322, %v144
    %v324 = vadd.f32 %v323, %v145
    %v325 = vadd.f32 %v324, %v146
    %v326 = vsel %vm181, %v147, 0.0
    %v327 = vadd.f32 %v325, %v326
    %328 = vadd.xlane.f32.xlu0 %v327
    %v329 = vpop.xlane.xlu0 %328
    %v330 = vadd.f32 %v148, %v149
    %v331 = vadd.f32 %v330, %v150
    %v332 = vadd.f32 %v331, %v151
    %v333 = vadd.f32 %v332, %v152
    %v334 = vadd.f32 %v333, %v153
    %v335 = vsel %vm181, %v154, 0.0
    %v336 = vadd.f32 %v334, %v335
    %337 = vadd.xlane.f32.xlu0 %v336
    %v338 = vpop.xlane.xlu0 %337
    %v339 = vadd.f32 %v155, %v156
    %v340 = vadd.f32 %v339, %v157
    %v341 = vadd.f32 %v340, %v158
    %v342 = vadd.f32 %v341, %v159
    %v343 = vadd.f32 %v342, %v160
    %v344 = vsel %vm181, %v161, 0.0
    %v345 = vadd.f32 %v343, %v344
    %346 = vadd.xlane.f32.xlu0 %v345
    %v347 = vpop.xlane.xlu0 %346
    %v348 = vadd.f32 %v162, %v163
    %v349 = vadd.f32 %v348, %v164
    %v350 = vadd.f32 %v349, %v165
    %v351 = vadd.f32 %v350, %v166
    %v352 = vadd.f32 %v351, %v167
    %v353 = vsel %vm181, %v168, 0.0
    %v354 = vadd.f32 %v352, %v353
    %355 = vadd.xlane.f32.xlu0 %v354
    %v356 = vpop.xlane.xlu0 %355
    %v357 = vadd.f32 %v169, %v170
    %v358 = vadd.f32 %v357, %v171
    %v359 = vadd.f32 %v358, %v172
    %v360 = vadd.f32 %v359, %v173
    %v361 = vadd.f32 %v360, %v174
    %v362 = vsel %vm181, %v175, 0.0
    %v363 = vadd.f32 %v361, %v362
    %364 = vadd.xlane.f32.xlu0 %v363
    %v365 = vpop.xlane.xlu0 %364
    %v366 = vrcp.pop 784.0
    %v367 = vmul.f32 %v185, %v366
    %v368 = vmul.f32 %v194, %v366
    %v369 = vmul.f32 %v203, %v366
    %v370 = vmul.f32 %v212, %v366
    %v371 = vmul.f32 %v221, %v366
    %v372 = vmul.f32 %v230, %v366
    %v373 = vmul.f32 %v239, %v366
    %v374 = vmul.f32 %v248, %v366
    %v375 = vmul.f32 %v257, %v366
    %v376 = vmul.f32 %v266, %v366
    %v377 = vmul.f32 %v275, %v366
    %v378 = vmul.f32 %v284, %v366
    %v379 = vmul.f32 %v293, %v366
    %v380 = vmul.f32 %v302, %v366
    %v381 = vmul.f32 %v311, %v366
    %v382 = vmul.f32 %v320, %v366
    %v383 = vmul.f32 %v329, %v366
    %v384 = vmul.f32 %v338, %v366
    %v385 = vmul.f32 %v347, %v366
    %v386 = vmul.f32 %v356, %v366
    %v387 = vmul.f32 %v365, %v366
    %v388 = vsub.f32 %v29, %v367
    %v389 = vsub.f32 %v30, %v367
    %v390 = vsub.f32 %v31, %v367
    %v391 = vsub.f32 %v32, %v367
    %v392 = vsub.f32 %v33, %v367
    %v393 = vsub.f32 %v34, %v367
    %v394 = vsub.f32 %v35, %v367
    %v395 = vsub.f32 %v36, %v368
    %v396 = vsub.f32 %v37, %v368
    %v397 = vsub.f32 %v38, %v368
    %v398 = vsub.f32 %v39, %v368
    %v399 = vsub.f32 %v40, %v368
    %v400 = vsub.f32 %v41, %v368
    %v401 = vsub.f32 %v42, %v368
    %v402 = vsub.f32 %v43, %v369
    %v403 = vsub.f32 %v44, %v369
    %v404 = vsub.f32 %v45, %v369
    %v405 = vsub.f32 %v46, %v369
    %v406 = vsub.f32 %v47, %v369
    %v407 = vsub.f32 %v48, %v369
    %v408 = vsub.f32 %v49, %v369
    %v409 = vsub.f32 %v50, %v370
    %v410 = vsub.f32 %v51, %v370
    %v411 = vsub.f32 %v52, %v370
    %v412 = vsub.f32 %v53, %v370
    %v413 = vsub.f32 %v54, %v370
    %v414 = vsub.f32 %v55, %v370
    %v415 = vsub.f32 %v56, %v370
    %v416 = vsub.f32 %v57, %v371
    %v417 = vsub.f32 %v58, %v371
    %v418 = vsub.f32 %v59, %v371
    %v419 = vsub.f32 %v60, %v371
    %v420 = vsub.f32 %v61, %v371
    %v421 = vsub.f32 %v62, %v371
    %v422 = vsub.f32 %v63, %v371
    %v423 = vsub.f32 %v64, %v372
    %v424 = vsub.f32 %v65, %v372
    %v425 = vsub.f32 %v66, %v372
    %v426 = vsub.f32 %v67, %v372
    %v427 = vsub.f32 %v68, %v372
    %v428 = vsub.f32 %v69, %v372
    %v429 = vsub.f32 %v70, %v372
    %v430 = vsub.f32 %v71, %v373
    %v431 = vsub.f32 %v72, %v373
    %v432 = vsub.f32 %v73, %v373
    %v433 = vsub.f32 %v74, %v373
    %v434 = vsub.f32 %v75, %v373
    %v435 = vsub.f32 %v76, %v373
    %v436 = vsub.f32 %v77, %v373
    %v437 = vsub.f32 %v78, %v374
    %v438 = vsub.f32 %v79, %v374
    %v439 = vsub.f32 %v80, %v374
    %v440 = vsub.f32 %v81, %v374
    %v441 = vsub.f32 %v82, %v374
    %v442 = vsub.f32 %v83, %v374
    %v443 = vsub.f32 %v84, %v374
    %v444 = vsub.f32 %v85, %v375
    %v445 = vsub.f32 %v86, %v375
    %v446 = vsub.f32 %v87, %v375
    %v447 = vsub.f32 %v88, %v375
    %v448 = vsub.f32 %v89, %v375
    %v449 = vsub.f32 %v90, %v375
    %v450 = vsub.f32 %v91, %v375
    %v451 = vsub.f32 %v92, %v376
    %v452 = vsub.f32 %v93, %v376
    %v453 = vsub.f32 %v94, %v376
    %v454 = vsub.f32 %v95, %v376
    %v455 = vsub.f32 %v96, %v376
    %v456 = vsub.f32 %v97, %v376
    %v457 = vsub.f32 %v98, %v376
    %v458 = vsub.f32 %v99, %v377
    %v459 = vsub.f32 %v100, %v377
    %v460 = vsub.f32 %v101, %v377
    %v461 = vsub.f32 %v102, %v377
    %v462 = vsub.f32 %v103, %v377
    %v463 = vsub.f32 %v104, %v377
    %v464 = vsub.f32 %v105, %v377
    %v465 = vsub.f32 %v106, %v378
    %v466 = vsub.f32 %v107, %v378
    %v467 = vsub.f32 %v108, %v378
    %v468 = vsub.f32 %v109, %v378
    %v469 = vsub.f32 %v110, %v378
    %v470 = vsub.f32 %v111, %v378
    %v471 = vsub.f32 %v112, %v378
    %v472 = vsub.f32 %v113, %v379
    %v473 = vsub.f32 %v114, %v379
    %v474 = vsub.f32 %v115, %v379
    %v475 = vsub.f32 %v116, %v379
    %v476 = vsub.f32 %v117, %v379
    %v477 = vsub.f32 %v118, %v379
    %v478 = vsub.f32 %v119, %v379
    %v479 = vsub.f32 %v120, %v380
    %v480 = vsub.f32 %v121, %v380
    %v481 = vsub.f32 %v122, %v380
    %v482 = vsub.f32 %v123, %v380
    %v483 = vsub.f32 %v124, %v380
    %v484 = vsub.f32 %v125, %v380
    %v485 = vsub.f32 %v126, %v380
    %v486 = vsub.f32 %v127, %v381
    %v487 = vsub.f32 %v128, %v381
    %v488 = vsub.f32 %v129, %v381
    %v489 = vsub.f32 %v130, %v381
    %v490 = vsub.f32 %v131, %v381
    %v491 = vsub.f32 %v132, %v381
    %v492 = vsub.f32 %v133, %v381
    %v493 = vsub.f32 %v134, %v382
    %v494 = vsub.f32 %v135, %v382
    %v495 = vsub.f32 %v136, %v382
    %v496 = vsub.f32 %v137, %v382
    %v497 = vsub.f32 %v138, %v382
    %v498 = vsub.f32 %v139, %v382
    %v499 = vsub.f32 %v140, %v382
    %v500 = vsub.f32 %v141, %v383
    %v501 = vsub.f32 %v142, %v383
    %v502 = vsub.f32 %v143, %v383
    %v503 = vsub.f32 %v144, %v383
    %v504 = vsub.f32 %v145, %v383
    %v505 = vsub.f32 %v146, %v383
    %v506 = vsub.f32 %v147, %v383
    %v507 = vsub.f32 %v148, %v384
    %v508 = vsub.f32 %v149, %v384
    %v509 = vsub.f32 %v150, %v384
    %v510 = vsub.f32 %v151, %v384
    %v511 = vsub.f32 %v152, %v384
    %v512 = vsub.f32 %v153, %v384
    %v513 = vsub.f32 %v154, %v384
    %v514 = vsub.f32 %v155, %v385
    %v515 = vsub.f32 %v156, %v385
    %v516 = vsub.f32 %v157, %v385
    %v517 = vsub.f32 %v158, %v385
    %v518 = vsub.f32 %v159, %v385
    %v519 = vsub.f32 %v160, %v385
    %v520 = vsub.f32 %v161, %v385
    %v521 = vsub.f32 %v162, %v386
    %v522 = vsub.f32 %v163, %v386
    %v523 = vsub.f32 %v164, %v386
    %v524 = vsub.f32 %v165, %v386
    %v525 = vsub.f32 %v166, %v386
    %v526 = vsub.f32 %v167, %v386
    %v527 = vsub.f32 %v168, %v386
    %v528 = vsub.f32 %v169, %v387
    %v529 = vsub.f32 %v170, %v387
    %v530 = vsub.f32 %v171, %v387
    %v531 = vsub.f32 %v172, %v387
    %v532 = vsub.f32 %v173, %v387
    %v533 = vsub.f32 %v174, %v387
    %v534 = vsub.f32 %v175, %v387
    %v535 = vmul.f32 %v388, %v388
    %v536 = vmul.f32 %v389, %v389
    %v537 = vmul.f32 %v390, %v390
    %v538 = vmul.f32 %v391, %v391
    %v539 = vmul.f32 %v392, %v392
    %v540 = vmul.f32 %v393, %v393
    %v541 = vmul.f32 %v394, %v394
    %v542 = vmul.f32 %v395, %v395
    %v543 = vmul.f32 %v396, %v396
    %v544 = vmul.f32 %v397, %v397
    %v545 = vmul.f32 %v398, %v398
    %v546 = vmul.f32 %v399, %v399
    %v547 = vmul.f32 %v400, %v400
    %v548 = vmul.f32 %v401, %v401
    %v549 = vmul.f32 %v402, %v402
    %v550 = vmul.f32 %v403, %v403
    %v551 = vmul.f32 %v404, %v404
    %v552 = vmul.f32 %v405, %v405
    %v553 = vmul.f32 %v406, %v406
    %v554 = vmul.f32 %v407, %v407
    %v555 = vmul.f32 %v408, %v408
    %v556 = vmul.f32 %v409, %v409
    %v557 = vmul.f32 %v410, %v410
    %v558 = vmul.f32 %v411, %v411
    %v559 = vmul.f32 %v412, %v412
    %v560 = vmul.f32 %v413, %v413
    %v561 = vmul.f32 %v414, %v414
    %v562 = vmul.f32 %v415, %v415
    %v563 = vmul.f32 %v416, %v416
    %v564 = vmul.f32 %v417, %v417
    %v565 = vmul.f32 %v418, %v418
    %v566 = vmul.f32 %v419, %v419
    %v567 = vmul.f32 %v420, %v420
    %v568 = vmul.f32 %v421, %v421
    %v569 = vmul.f32 %v422, %v422
    %v570 = vmul.f32 %v423, %v423
    %v571 = vmul.f32 %v424, %v424
    %v572 = vmul.f32 %v425, %v425
    %v573 = vmul.f32 %v426, %v426
    %v574 = vmul.f32 %v427, %v427
    %v575 = vmul.f32 %v428, %v428
    %v576 = vmul.f32 %v429, %v429
    %v577 = vmul.f32 %v430, %v430
    %v578 = vmul.f32 %v431, %v431
    %v579 = vmul.f32 %v432, %v432
    %v580 = vmul.f32 %v433, %v433
    %v581 = vmul.f32 %v434, %v434
    %v582 = vmul.f32 %v435, %v435
    %v583 = vmul.f32 %v436, %v436
    %v584 = vmul.f32 %v437, %v437
    %v585 = vmul.f32 %v438, %v438
    %v586 = vmul.f32 %v439, %v439
    %v587 = vmul.f32 %v440, %v440
    %v588 = vmul.f32 %v441, %v441
    %v589 = vmul.f32 %v442, %v442
    %v590 = vmul.f32 %v443, %v443
    %v591 = vmul.f32 %v444, %v444
    %v592 = vmul.f32 %v445, %v445
    %v593 = vmul.f32 %v446, %v446
    %v594 = vmul.f32 %v447, %v447
    %v595 = vmul.f32 %v448, %v448
    %v596 = vmul.f32 %v449, %v449
    %v597 = vmul.f32 %v450, %v450
    %v598 = vmul.f32 %v451, %v451
    %v599 = vmul.f32 %v452, %v452
    %v600 = vmul.f32 %v453, %v453
    %v601 = vmul.f32 %v454, %v454
    %v602 = vmul.f32 %v455, %v455
    %v603 = vmul.f32 %v456, %v456
    %v604 = vmul.f32 %v457, %v457
    %v605 = vmul.f32 %v458, %v458
    %v606 = vmul.f32 %v459, %v459
    %v607 = vmul.f32 %v460, %v460
    %v608 = vmul.f32 %v461, %v461
    %v609 = vmul.f32 %v462, %v462
    %v610 = vmul.f32 %v463, %v463
    %v611 = vmul.f32 %v464, %v464
    %v612 = vmul.f32 %v465, %v465
    %v613 = vmul.f32 %v466, %v466
    %v614 = vmul.f32 %v467, %v467
    %v615 = vmul.f32 %v468, %v468
    %v616 = vmul.f32 %v469, %v469
    %v617 = vmul.f32 %v470, %v470
    %v618 = vmul.f32 %v471, %v471
    %v619 = vmul.f32 %v472, %v472
    %v620 = vmul.f32 %v473, %v473
    %v621 = vmul.f32 %v474, %v474
    %v622 = vmul.f32 %v475, %v475
    %v623 = vmul.f32 %v476, %v476
    %v624 = vmul.f32 %v477, %v477
    %v625 = vmul.f32 %v478, %v478
    %v626 = vmul.f32 %v479, %v479
    %v627 = vmul.f32 %v480, %v480
    %v628 = vmul.f32 %v481, %v481
    %v629 = vmul.f32 %v482, %v482
    %v630 = vmul.f32 %v483, %v483
    %v631 = vmul.f32 %v484, %v484
    %v632 = vmul.f32 %v485, %v485
    %v633 = vmul.f32 %v486, %v486
    %v634 = vmul.f32 %v487, %v487
    %v635 = vmul.f32 %v488, %v488
    %v636 = vmul.f32 %v489, %v489
    %v637 = vmul.f32 %v490, %v490
    %v638 = vmul.f32 %v491, %v491
    %v639 = vmul.f32 %v492, %v492
    %v640 = vmul.f32 %v493, %v493
    %v641 = vmul.f32 %v494, %v494
    %v642 = vmul.f32 %v495, %v495
    %v643 = vmul.f32 %v496, %v496
    %v644 = vmul.f32 %v497, %v497
    %v645 = vmul.f32 %v498, %v498
    %v646 = vmul.f32 %v499, %v499
    %v647 = vmul.f32 %v500, %v500
    %v648 = vmul.f32 %v501, %v501
    %v649 = vmul.f32 %v502, %v502
    %v650 = vmul.f32 %v503, %v503
    %v651 = vmul.f32 %v504, %v504
    %v652 = vmul.f32 %v505, %v505
    %v653 = vmul.f32 %v506, %v506
    %v654 = vmul.f32 %v507, %v507
    %v655 = vmul.f32 %v508, %v508
    %v656 = vmul.f32 %v509, %v509
    %v657 = vmul.f32 %v510, %v510
    %v658 = vmul.f32 %v511, %v511
    %v659 = vmul.f32 %v512, %v512
    %v660 = vmul.f32 %v513, %v513
    %v661 = vmul.f32 %v514, %v514
    %v662 = vmul.f32 %v515, %v515
    %v663 = vmul.f32 %v516, %v516
    %v664 = vmul.f32 %v517, %v517
    %v665 = vmul.f32 %v518, %v518
    %v666 = vmul.f32 %v519, %v519
    %v667 = vmul.f32 %v520, %v520
    %v668 = vmul.f32 %v521, %v521
    %v669 = vmul.f32 %v522, %v522
    %v670 = vmul.f32 %v523, %v523
    %v671 = vmul.f32 %v524, %v524
    %v672 = vmul.f32 %v525, %v525
    %v673 = vmul.f32 %v526, %v526
    %v674 = vmul.f32 %v527, %v527
    %v675 = vmul.f32 %v528, %v528
    %v676 = vmul.f32 %v529, %v529
    %v677 = vmul.f32 %v530, %v530
    %v678 = vmul.f32 %v531, %v531
    %v679 = vmul.f32 %v532, %v532
    %v680 = vmul.f32 %v533, %v533
    %v681 = vmul.f32 %v534, %v534
    %v682 = vadd.f32 %v535, %v536
    %v683 = vadd.f32 %v682, %v537
    %v684 = vadd.f32 %v683, %v538
    %v685 = vadd.f32 %v684, %v539
    %v686 = vadd.f32 %v685, %v540
    %v687 = vsel %vm181, %v541, 0.0
    %v688 = vadd.f32 %v686, %v687
    %689 = vadd.xlane.f32.xlu0 %v688
    %v690 = vpop.xlane.xlu0 %689
    %v691 = vadd.f32 %v542, %v543
    %v692 = vadd.f32 %v691, %v544
    %v693 = vadd.f32 %v692, %v545
    %v694 = vadd.f32 %v693, %v546
    %v695 = vadd.f32 %v694, %v547
    %v696 = vsel %vm181, %v548, 0.0
    %v697 = vadd.f32 %v695, %v696
    %698 = vadd.xlane.f32.xlu0 %v697
    %v699 = vpop.xlane.xlu0 %698
    %v700 = vadd.f32 %v549, %v550
    %v701 = vadd.f32 %v700, %v551
    %v702 = vadd.f32 %v701, %v552
    %v703 = vadd.f32 %v702, %v553
    %v704 = vadd.f32 %v703, %v554
    %v705 = vsel %vm181, %v555, 0.0
    %v706 = vadd.f32 %v704, %v705
    %707 = vadd.xlane.f32.xlu0 %v706
    %v708 = vpop.xlane.xlu0 %707
    %v709 = vadd.f32 %v556, %v557
    %v710 = vadd.f32 %v709, %v558
    %v711 = vadd.f32 %v710, %v559
    %v712 = vadd.f32 %v711, %v560
    %v713 = vadd.f32 %v712, %v561
    %v714 = vsel %vm181, %v562, 0.0
    %v715 = vadd.f32 %v713, %v714
    %716 = vadd.xlane.f32.xlu0 %v715
    %v717 = vpop.xlane.xlu0 %716
    %v718 = vadd.f32 %v563, %v564
    %v719 = vadd.f32 %v718, %v565
    %v720 = vadd.f32 %v719, %v566
    %v721 = vadd.f32 %v720, %v567
    %v722 = vadd.f32 %v721, %v568
    %v723 = vsel %vm181, %v569, 0.0
    %v724 = vadd.f32 %v722, %v723
    %725 = vadd.xlane.f32.xlu0 %v724
    %v726 = vpop.xlane.xlu0 %725
    %v727 = vadd.f32 %v570, %v571
    %v728 = vadd.f32 %v727, %v572
    %v729 = vadd.f32 %v728, %v573
    %v730 = vadd.f32 %v729, %v574
    %v731 = vadd.f32 %v730, %v575
    %v732 = vsel %vm181, %v576, 0.0
    %v733 = vadd.f32 %v731, %v732
    %734 = vadd.xlane.f32.xlu0 %v733
    %v735 = vpop.xlane.xlu0 %734
    %v736 = vadd.f32 %v577, %v578
    %v737 = vadd.f32 %v736, %v579
    %v738 = vadd.f32 %v737, %v580
    %v739 = vadd.f32 %v738, %v581
    %v740 = vadd.f32 %v739, %v582
    %v741 = vsel %vm181, %v583, 0.0
    %v742 = vadd.f32 %v740, %v741
    %743 = vadd.xlane.f32.xlu0 %v742
    %v744 = vpop.xlane.xlu0 %743
    %v745 = vadd.f32 %v584, %v585
    %v746 = vadd.f32 %v745, %v586
    %v747 = vadd.f32 %v746, %v587
    %v748 = vadd.f32 %v747, %v588
    %v749 = vadd.f32 %v748, %v589
    %v750 = vsel %vm181, %v590, 0.0
    %v751 = vadd.f32 %v749, %v750
    %752 = vadd.xlane.f32.xlu0 %v751
    %v753 = vpop.xlane.xlu0 %752
    %v754 = vadd.f32 %v591, %v592
    %v755 = vadd.f32 %v754, %v593
    %v756 = vadd.f32 %v755, %v594
    %v757 = vadd.f32 %v756, %v595
    %v758 = vadd.f32 %v757, %v596
    %v759 = vsel %vm181, %v597, 0.0
    %v760 = vadd.f32 %v758, %v759
    %761 = vadd.xlane.f32.xlu0 %v760
    %v762 = vpop.xlane.xlu0 %761
    %v763 = vadd.f32 %v598, %v599
    %v764 = vadd.f32 %v763, %v600
    %v765 = vadd.f32 %v764, %v601
    %v766 = vadd.f32 %v765, %v602
    %v767 = vadd.f32 %v766, %v603
    %v768 = vsel %vm181, %v604, 0.0
    %v769 = vadd.f32 %v767, %v768
    %770 = vadd.xlane.f32.xlu0 %v769
    %v771 = vpop.xlane.xlu0 %770
    %v772 = vadd.f32 %v605, %v606
    %v773 = vadd.f32 %v772, %v607
    %v774 = vadd.f32 %v773, %v608
    %v775 = vadd.f32 %v774, %v609
    %v776 = vadd.f32 %v775, %v610
    %v777 = vsel %vm181, %v611, 0.0
    %v778 = vadd.f32 %v776, %v777
    %779 = vadd.xlane.f32.xlu0 %v778
    %v780 = vpop.xlane.xlu0 %779
    %v781 = vadd.f32 %v612, %v613
    %v782 = vadd.f32 %v781, %v614
    %v783 = vadd.f32 %v782, %v615
    %v784 = vadd.f32 %v783, %v616
    %v785 = vadd.f32 %v784, %v617
    %v786 = vsel %vm181, %v618, 0.0
    %v787 = vadd.f32 %v785, %v786
    %788 = vadd.xlane.f32.xlu0 %v787
    %v789 = vpop.xlane.xlu0 %788
    %v790 = vadd.f32 %v619, %v620
    %v791 = vadd.f32 %v790, %v621
    %v792 = vadd.f32 %v791, %v622
    %v793 = vadd.f32 %v792, %v623
    %v794 = vadd.f32 %v793, %v624
    %v795 = vsel %vm181, %v625, 0.0
    %v796 = vadd.f32 %v794, %v795
    %797 = vadd.xlane.f32.xlu0 %v796
    %v798 = vpop.xlane.xlu0 %797
    %v799 = vadd.f32 %v626, %v627
    %v800 = vadd.f32 %v799, %v628
    %v801 = vadd.f32 %v800, %v629
    %v802 = vadd.f32 %v801, %v630
    %v803 = vadd.f32 %v802, %v631
    %v804 = vsel %vm181, %v632, 0.0
    %v805 = vadd.f32 %v803, %v804
    %806 = vadd.xlane.f32.xlu0 %v805
    %v807 = vpop.xlane.xlu0 %806
    %v808 = vadd.f32 %v633, %v634
    %v809 = vadd.f32 %v808, %v635
    %v810 = vadd.f32 %v809, %v636
    %v811 = vadd.f32 %v810, %v637
    %v812 = vadd.f32 %v811, %v638
    %v813 = vsel %vm181, %v639, 0.0
    %v814 = vadd.f32 %v812, %v813
    %815 = vadd.xlane.f32.xlu0 %v814
    %v816 = vpop.xlane.xlu0 %815
    %v817 = vadd.f32 %v640, %v641
    %v818 = vadd.f32 %v817, %v642
    %v819 = vadd.f32 %v818, %v643
    %v820 = vadd.f32 %v819, %v644
    %v821 = vadd.f32 %v820, %v645
    %v822 = vsel %vm181, %v646, 0.0
    %v823 = vadd.f32 %v821, %v822
    %824 = vadd.xlane.f32.xlu0 %v823
    %v825 = vpop.xlane.xlu0 %824
    %v826 = vadd.f32 %v647, %v648
    %v827 = vadd.f32 %v826, %v649
    %v828 = vadd.f32 %v827, %v650
    %v829 = vadd.f32 %v828, %v651
    %v830 = vadd.f32 %v829, %v652
    %v831 = vsel %vm181, %v653, 0.0
    %v832 = vadd.f32 %v830, %v831
    %833 = vadd.xlane.f32.xlu0 %v832
    %v834 = vpop.xlane.xlu0 %833
    %v835 = vadd.f32 %v654, %v655
    %v836 = vadd.f32 %v835, %v656
    %v837 = vadd.f32 %v836, %v657
    %v838 = vadd.f32 %v837, %v658
    %v839 = vadd.f32 %v838, %v659
    %v840 = vsel %vm181, %v660, 0.0
    %v841 = vadd.f32 %v839, %v840
    %842 = vadd.xlane.f32.xlu0 %v841
    %v843 = vpop.xlane.xlu0 %842
    %v844 = vadd.f32 %v661, %v662
    %v845 = vadd.f32 %v844, %v663
    %v846 = vadd.f32 %v845, %v664
    %v847 = vadd.f32 %v846, %v665
    %v848 = vadd.f32 %v847, %v666
    %v849 = vsel %vm181, %v667, 0.0
    %v850 = vadd.f32 %v848, %v849
    %851 = vadd.xlane.f32.xlu0 %v850
    %v852 = vpop.xlane.xlu0 %851
    %v853 = vadd.f32 %v668, %v669
    %v854 = vadd.f32 %v853, %v670
    %v855 = vadd.f32 %v854, %v671
    %v856 = vadd.f32 %v855, %v672
    %v857 = vadd.f32 %v856, %v673
    %v858 = vsel %vm181, %v674, 0.0
    %v859 = vadd.f32 %v857, %v858
    %860 = vadd.xlane.f32.xlu0 %v859
    %v861 = vpop.xlane.xlu0 %860
    %v862 = vadd.f32 %v675, %v676
    %v863 = vadd.f32 %v862, %v677
    %v864 = vadd.f32 %v863, %v678
    %v865 = vadd.f32 %v864, %v679
    %v866 = vadd.f32 %v865, %v680
    %v867 = vsel %vm181, %v681, 0.0
    %v868 = vadd.f32 %v866, %v867
    %869 = vadd.xlane.f32.xlu0 %v868
    %v870 = vpop.xlane.xlu0 %869
    %v871 = vmul.f32 %v690, %v366
    %v872 = vmul.f32 %v699, %v366
    %v873 = vmul.f32 %v708, %v366
    %v874 = vmul.f32 %v717, %v366
    %v875 = vmul.f32 %v726, %v366
    %v876 = vmul.f32 %v735, %v366
    %v877 = vmul.f32 %v744, %v366
    %v878 = vmul.f32 %v753, %v366
    %v879 = vmul.f32 %v762, %v366
    %v880 = vmul.f32 %v771, %v366
    %v881 = vmul.f32 %v780, %v366
    %v882 = vmul.f32 %v789, %v366
    %v883 = vmul.f32 %v798, %v366
    %v884 = vmul.f32 %v807, %v366
    %v885 = vmul.f32 %v816, %v366
    %v886 = vmul.f32 %v825, %v366
    %v887 = vmul.f32 %v834, %v366
    %v888 = vmul.f32 %v843, %v366
    %v889 = vmul.f32 %v852, %v366
    %v890 = vmul.f32 %v861, %v366
    %v891 = vmul.f32 %v870, %v366
    %v892 = vadd.f32 %v871, 1e-05
    %v893 = vadd.f32 %v872, 1e-05
    %v894 = vadd.f32 %v873, 1e-05
    %v895 = vadd.f32 %v874, 1e-05
    %v896 = vadd.f32 %v875, 1e-05
    %v897 = vadd.f32 %v876, 1e-05
    %v898 = vadd.f32 %v877, 1e-05
    %v899 = vadd.f32 %v878, 1e-05
    %v900 = vadd.f32 %v879, 1e-05
    %v901 = vadd.f32 %v880, 1e-05
    %v902 = vadd.f32 %v881, 1e-05
    %v903 = vadd.f32 %v882, 1e-05
    %v904 = vadd.f32 %v883, 1e-05
    %v905 = vadd.f32 %v884, 1e-05
    %v906 = vadd.f32 %v885, 1e-05
    %v907 = vadd.f32 %v886, 1e-05
    %v908 = vadd.f32 %v887, 1e-05
    %v909 = vadd.f32 %v888, 1e-05
    %v910 = vadd.f32 %v889, 1e-05
    %v911 = vadd.f32 %v890, 1e-05
    %v912 = vadd.f32 %v891, 1e-05
    %v913 = vrsqrt.pop %v892
    %v914 = vrsqrt.pop %v893
    %v915 = vrsqrt.pop %v894
    %v916 = vrsqrt.pop %v895
    %v917 = vrsqrt.pop %v896
    %v918 = vrsqrt.pop %v897
    %v919 = vrsqrt.pop %v898
    %v920 = vrsqrt.pop %v899
    %v921 = vrsqrt.pop %v900
    %v922 = vrsqrt.pop %v901
    %v923 = vrsqrt.pop %v902
    %v924 = vrsqrt.pop %v903
    %v925 = vrsqrt.pop %v904
    %v926 = vrsqrt.pop %v905
    %v927 = vrsqrt.pop %v906
    %v928 = vrsqrt.pop %v907
    %v929 = vrsqrt.pop %v908
    %v930 = vrsqrt.pop %v909
    %v931 = vrsqrt.pop %v910
    %v932 = vrsqrt.pop %v911
    %v933 = vrsqrt.pop %v912
    %v934 = vld [vmem:[%s1] sm:$0xff]
    %v935 = vld [vmem:[%s1 + $0x8] sm:$0xff]
    %v936 = vld [vmem:[%s1 + $0x10] sm:$0xff]
    %v937 = vld [vmem:[%s1 + $0x18] sm:$0xff]
    %v938 = vld [vmem:[%s1 + $0x20] sm:$0xff]
    %v939 = vld [vmem:[%s1 + $0x28] sm:$0xff]
    %v940 = vld [vmem:[%s1 + $0x30] sm:$0xff]
    %v941 = vld [vmem:[%s1 + $0x38] sm:$0xff]
    %v942 = vld [vmem:[%s1 + $0x40] sm:$0xff]
    %v943 = vld [vmem:[%s1 + $0x48] sm:$0xff]
    %v944 = vld [vmem:[%s1 + $0x50] sm:$0xff]
    %v945 = vld [vmem:[%s1 + $0x58] sm:$0xff]
    %v946 = vld [vmem:[%s1 + $0x60] sm:$0xff]
    %v947 = vld [vmem:[%s1 + $0x68] sm:$0xff]
    %v948 = vld [vmem:[%s1 + $0x70] sm:$0xff]
    %v949 = vld [vmem:[%s1 + $0x78] sm:$0xff]
    %v950 = vld [vmem:[%s1 + $0x80] sm:$0xff]
    %v951 = vld [vmem:[%s1 + $0x88] sm:$0xff]
    %v952 = vld [vmem:[%s1 + $0x90] sm:$0xff]
    %v953 = vld [vmem:[%s1 + $0x98] sm:$0xff]
    %v954 = vld [vmem:[%s1 + $0xa0] sm:$0xff]
    %v955 = vmul.f32 %v934, %v913
    %v956 = vmul.f32 %v935, %v914
    %v957 = vmul.f32 %v936, %v915
    %v958 = vmul.f32 %v937, %v916
    %v959 = vmul.f32 %v938, %v917
    %v960 = vmul.f32 %v939, %v918
    %v961 = vmul.f32 %v940, %v919
    %v962 = vmul.f32 %v941, %v920
    %v963 = vmul.f32 %v942, %v921
    %v964 = vmul.f32 %v943, %v922
    %v965 = vmul.f32 %v944, %v923
    %v966 = vmul.f32 %v945, %v924
    %v967 = vmul.f32 %v946, %v925
    %v968 = vmul.f32 %v947, %v926
    %v969 = vmul.f32 %v948, %v927
    %v970 = vmul.f32 %v949, %v928
    %v971 = vmul.f32 %v950, %v929
    %v972 = vmul.f32 %v951, %v930
    %v973 = vmul.f32 %v952, %v931
    %v974 = vmul.f32 %v953, %v932
    %v975 = vmul.f32 %v954, %v933
    %v976 = vld [vmem:[%s2] sm:$0xff]
    %v977 = vld [vmem:[%s2 + $0x8] sm:$0xff]
    %v978 = vld [vmem:[%s2 + $0x10] sm:$0xff]
    %v979 = vld [vmem:[%s2 + $0x18] sm:$0xff]
    %v980 = vld [vmem:[%s2 + $0x20] sm:$0xff]
    %v981 = vld [vmem:[%s2 + $0x28] sm:$0xff]
    %v982 = vld [vmem:[%s2 + $0x30] sm:$0xff]
    %v983 = vld [vmem:[%s2 + $0x38] sm:$0xff]
    %v984 = vld [vmem:[%s2 + $0x40] sm:$0xff]
    %v985 = vld [vmem:[%s2 + $0x48] sm:$0xff]
    %v986 = vld [vmem:[%s2 + $0x50] sm:$0xff]
    %v987 = vld [vmem:[%s2 + $0x58] sm:$0xff]
    %v988 = vld [vmem:[%s2 + $0x60] sm:$0xff]
    %v989 = vld [vmem:[%s2 + $0x68] sm:$0xff]
    %v990 = vld [vmem:[%s2 + $0x70] sm:$0xff]
    %v991 = vld [vmem:[%s2 + $0x78] sm:$0xff]
    %v992 = vld [vmem:[%s2 + $0x80] sm:$0xff]
    %v993 = vld [vmem:[%s2 + $0x88] sm:$0xff]
    %v994 = vld [vmem:[%s2 + $0x90] sm:$0xff]
    %v995 = vld [vmem:[%s2 + $0x98] sm:$0xff]
    %v996 = vld [vmem:[%s2 + $0xa0] sm:$0xff]
    %v997 = vmul.f32 %v367, %v955
    %v998 = vmul.f32 %v368, %v956
    %v999 = vmul.f32 %v369, %v957
    %v1000 = vmul.f32 %v370, %v958
    %v1001 = vmul.f32 %v371, %v959
    %v1002 = vmul.f32 %v372, %v960
    %v1003 = vmul.f32 %v373, %v961
    %v1004 = vmul.f32 %v374, %v962
    %v1005 = vmul.f32 %v375, %v963
    %v1006 = vmul.f32 %v376, %v964
    %v1007 = vmul.f32 %v377, %v965
    %v1008 = vmul.f32 %v378, %v966
    %v1009 = vmul.f32 %v379, %v967
    %v1010 = vmul.f32 %v380, %v968
    %v1011 = vmul.f32 %v381, %v969
    %v1012 = vmul.f32 %v382, %v970
    %v1013 = vmul.f32 %v383, %v971
    %v1014 = vmul.f32 %v384, %v972
    %v1015 = vmul.f32 %v385, %v973
    %v1016 = vmul.f32 %v386, %v974
    %v1017 = vmul.f32 %v387, %v975
    %v1018 = vsub.f32 %v976, %v997
    %v1019 = vsub.f32 %v977, %v998
    %v1020 = vsub.f32 %v978, %v999
    %v1021 = vsub.f32 %v979, %v1000
    %v1022 = vsub.f32 %v980, %v1001
    %v1023 = vsub.f32 %v981, %v1002
    %v1024 = vsub.f32 %v982, %v1003
    %v1025 = vsub.f32 %v983, %v1004
    %v1026 = vsub.f32 %v984, %v1005
    %v1027 = vsub.f32 %v985, %v1006
    %v1028 = vsub.f32 %v986, %v1007
    %v1029 = vsub.f32 %v987, %v1008
    %v1030 = vsub.f32 %v988, %v1009
    %v1031 = vsub.f32 %v989, %v1010
    %v1032 = vsub.f32 %v990, %v1011
    %v1033 = vsub.f32 %v991, %v1012
    %v1034 = vsub.f32 %v992, %v1013
    %v1035 = vsub.f32 %v993, %v1014
    %v1036 = vsub.f32 %v994, %v1015
    %v1037 = vsub.f32 %v995, %v1016
    %v1038 = vsub.f32 %v996, %v1017
    %1040 = vset.pattern.permute.xlu0 0
    %1041 = vperm.xlu0 %1040, %v955
    %v1042 = vpop.permute.xlu0 %1041
    %1045 = vset.pattern.permute.xlu0 0
    %1046 = vperm.xlu0 %1045, %v956
    %v1047 = vpop.permute.xlu0 %1046
    %1050 = vset.pattern.permute.xlu0 0
    %1051 = vperm.xlu0 %1050, %v957
    %v1052 = vpop.permute.xlu0 %1051
    %1055 = vset.pattern.permute.xlu0 0
    %1056 = vperm.xlu0 %1055, %v958
    %v1057 = vpop.permute.xlu0 %1056
    %1060 = vset.pattern.permute.xlu0 0
    %1061 = vperm.xlu0 %1060, %v959
    %v1062 = vpop.permute.xlu0 %1061
    %1065 = vset.pattern.permute.xlu0 0
    %1066 = vperm.xlu0 %1065, %v960
    %v1067 = vpop.permute.xlu0 %1066
    %1070 = vset.pattern.permute.xlu0 0
    %1071 = vperm.xlu0 %1070, %v961
    %v1072 = vpop.permute.xlu0 %1071
    %1075 = vset.pattern.permute.xlu0 0
    %1076 = vperm.xlu0 %1075, %v962
    %v1077 = vpop.permute.xlu0 %1076
    %1080 = vset.pattern.permute.xlu0 0
    %1081 = vperm.xlu0 %1080, %v963
    %v1082 = vpop.permute.xlu0 %1081
    %1085 = vset.pattern.permute.xlu0 0
    %1086 = vperm.xlu0 %1085, %v964
    %v1087 = vpop.permute.xlu0 %1086
    %1090 = vset.pattern.permute.xlu0 0
    %1091 = vperm.xlu0 %1090, %v965
    %v1092 = vpop.permute.xlu0 %1091
    %1095 = vset.pattern.permute.xlu0 0
    %1096 = vperm.xlu0 %1095, %v966
    %v1097 = vpop.permute.xlu0 %1096
    %1100 = vset.pattern.permute.xlu0 0
    %1101 = vperm.xlu0 %1100, %v967
    %v1102 = vpop.permute.xlu0 %1101
    %1105 = vset.pattern.permute.xlu0 0
    %1106 = vperm.xlu0 %1105, %v968
    %v1107 = vpop.permute.xlu0 %1106
    %1110 = vset.pattern.permute.xlu0 0
    %1111 = vperm.xlu0 %1110, %v969
    %v1112 = vpop.permute.xlu0 %1111
    %1115 = vset.pattern.permute.xlu0 0
    %1116 = vperm.xlu0 %1115, %v970
    %v1117 = vpop.permute.xlu0 %1116
    %1120 = vset.pattern.permute.xlu0 0
    %1121 = vperm.xlu0 %1120, %v971
    %v1122 = vpop.permute.xlu0 %1121
    %1125 = vset.pattern.permute.xlu0 0
    %1126 = vperm.xlu0 %1125, %v972
    %v1127 = vpop.permute.xlu0 %1126
    %1130 = vset.pattern.permute.xlu0 0
    %1131 = vperm.xlu0 %1130, %v973
    %v1132 = vpop.permute.xlu0 %1131
    %1135 = vset.pattern.permute.xlu0 0
    %1136 = vperm.xlu0 %1135, %v974
    %v1137 = vpop.permute.xlu0 %1136
    %1140 = vset.pattern.permute.xlu0 0
    %1141 = vperm.xlu0 %1140, %v975
    %v1142 = vpop.permute.xlu0 %1141
    %v1144 = vmul.f32 %v29, %v1042
    %v1145 = vmul.f32 %v30, %v1042
    %v1146 = vmul.f32 %v31, %v1042
    %v1147 = vmul.f32 %v32, %v1042
    %v1148 = vmul.f32 %v33, %v1042
    %v1149 = vmul.f32 %v34, %v1042
    %v1150 = vmul.f32 %v35, %v1042
    %v1151 = vmul.f32 %v36, %v1047
    %v1152 = vmul.f32 %v37, %v1047
    %v1153 = vmul.f32 %v38, %v1047
    %v1154 = vmul.f32 %v39, %v1047
    %v1155 = vmul.f32 %v40, %v1047
    %v1156 = vmul.f32 %v41, %v1047
    %v1157 = vmul.f32 %v42, %v1047
    %v1158 = vmul.f32 %v43, %v1052
    %v1159 = vmul.f32 %v44, %v1052
    %v1160 = vmul.f32 %v45, %v1052
    %v1161 = vmul.f32 %v46, %v1052
    %v1162 = vmul.f32 %v47, %v1052
    %v1163 = vmul.f32 %v48, %v1052
    %v1164 = vmul.f32 %v49, %v1052
    %v1165 = vmul.f32 %v50, %v1057
    %v1166 = vmul.f32 %v51, %v1057
    %v1167 = vmul.f32 %v52, %v1057
    %v1168 = vmul.f32 %v53, %v1057
    %v1169 = vmul.f32 %v54, %v1057
    %v1170 = vmul.f32 %v55, %v1057
    %v1171 = vmul.f32 %v56, %v1057
    %v1172 = vmul.f32 %v57, %v1062
    %v1173 = vmul.f32 %v58, %v1062
    %v1174 = vmul.f32 %v59, %v1062
    %v1175 = vmul.f32 %v60, %v1062
    %v1176 = vmul.f32 %v61, %v1062
    %v1177 = vmul.f32 %v62, %v1062
    %v1178 = vmul.f32 %v63, %v1062
    %v1179 = vmul.f32 %v64, %v1067
    %v1180 = vmul.f32 %v65, %v1067
    %v1181 = vmul.f32 %v66, %v1067
    %v1182 = vmul.f32 %v67, %v1067
    %v1183 = vmul.f32 %v68, %v1067
    %v1184 = vmul.f32 %v69, %v1067
    %v1185 = vmul.f32 %v70, %v1067
    %v1186 = vmul.f32 %v71, %v1072
    %v1187 = vmul.f32 %v72, %v1072
    %v1188 = vmul.f32 %v73, %v1072
    %v1189 = vmul.f32 %v74, %v1072
    %v1190 = vmul.f32 %v75, %v1072
    %v1191 = vmul.f32 %v76, %v1072
    %v1192 = vmul.f32 %v77, %v1072
    %v1193 = vmul.f32 %v78, %v1077
    %v1194 = vmul.f32 %v79, %v1077
    %v1195 = vmul.f32 %v80, %v1077
    %v1196 = vmul.f32 %v81, %v1077
    %v1197 = vmul.f32 %v82, %v1077
    %v1198 = vmul.f32 %v83, %v1077
    %v1199 = vmul.f32 %v84, %v1077
    %v1200 = vmul.f32 %v85, %v1082
    %v1201 = vmul.f32 %v86, %v1082
    %v1202 = vmul.f32 %v87, %v1082
    %v1203 = vmul.f32 %v88, %v1082
    %v1204 = vmul.f32 %v89, %v1082
    %v1205 = vmul.f32 %v90, %v1082
    %v1206 = vmul.f32 %v91, %v1082
    %v1207 = vmul.f32 %v92, %v1087
    %v1208 = vmul.f32 %v93, %v1087
    %v1209 = vmul.f32 %v94, %v1087
    %v1210 = vmul.f32 %v95, %v1087
    %v1211 = vmul.f32 %v96, %v1087
    %v1212 = vmul.f32 %v97, %v1087
    %v1213 = vmul.f32 %v98, %v1087
    %v1214 = vmul.f32 %v99, %v1092
    %v1215 = vmul.f32 %v100, %v1092
    %v1216 = vmul.f32 %v101, %v1092
    %v1217 = vmul.f32 %v102, %v1092
    %v1218 = vmul.f32 %v103, %v1092
    %v1219 = vmul.f32 %v104, %v1092
    %v1220 = vmul.f32 %v105, %v1092
    %v1221 = vmul.f32 %v106, %v1097
    %v1222 = vmul.f32 %v107, %v1097
    %v1223 = vmul.f32 %v108, %v1097
    %v1224 = vmul.f32 %v109, %v1097
    %v1225 = vmul.f32 %v110, %v1097
    %v1226 = vmul.f32 %v111, %v1097
    %v1227 = vmul.f32 %v112, %v1097
    %v1228 = vmul.f32 %v113, %v1102
    %v1229 = vmul.f32 %v114, %v1102
    %v1230 = vmul.f32 %v115, %v1102
    %v1231 = vmul.f32 %v116, %v1102
    %v1232 = vmul.f32 %v117, %v1102
    %v1233 = vmul.f32 %v118, %v1102
    %v1234 = vmul.f32 %v119, %v1102
    %v1235 = vmul.f32 %v120, %v1107
    %v1236 = vmul.f32 %v121, %v1107
    %v1237 = vmul.f32 %v122, %v1107
    %v1238 = vmul.f32 %v123, %v1107
    %v1239 = vmul.f32 %v124, %v1107
    %v1240 = vmul.f32 %v125, %v1107
    %v1241 = vmul.f32 %v126, %v1107
    %v1242 = vmul.f32 %v127, %v1112
    %v1243 = vmul.f32 %v128, %v1112
    %v1244 = vmul.f32 %v129, %v1112
    %v1245 = vmul.f32 %v130, %v1112
    %v1246 = vmul.f32 %v131, %v1112
    %v1247 = vmul.f32 %v132, %v1112
    %v1248 = vmul.f32 %v133, %v1112
    %v1249 = vmul.f32 %v134, %v1117
    %v1250 = vmul.f32 %v135, %v1117
    %v1251 = vmul.f32 %v136, %v1117
    %v1252 = vmul.f32 %v137, %v1117
    %v1253 = vmul.f32 %v138, %v1117
    %v1254 = vmul.f32 %v139, %v1117
    %v1255 = vmul.f32 %v140, %v1117
    %v1256 = vmul.f32 %v141, %v1122
    %v1257 = vmul.f32 %v142, %v1122
    %v1258 = vmul.f32 %v143, %v1122
    %v1259 = vmul.f32 %v144, %v1122
    %v1260 = vmul.f32 %v145, %v1122
    %v1261 = vmul.f32 %v146, %v1122
    %v1262 = vmul.f32 %v147, %v1122
    %v1263 = vmul.f32 %v148, %v1127
    %v1264 = vmul.f32 %v149, %v1127
    %v1265 = vmul.f32 %v150, %v1127
    %v1266 = vmul.f32 %v151, %v1127
    %v1267 = vmul.f32 %v152, %v1127
    %v1268 = vmul.f32 %v153, %v1127
    %v1269 = vmul.f32 %v154, %v1127
    %v1270 = vmul.f32 %v155, %v1132
    %v1271 = vmul.f32 %v156, %v1132
    %v1272 = vmul.f32 %v157, %v1132
    %v1273 = vmul.f32 %v158, %v1132
    %v1274 = vmul.f32 %v159, %v1132
    %v1275 = vmul.f32 %v160, %v1132
    %v1276 = vmul.f32 %v161, %v1132
    %v1277 = vmul.f32 %v162, %v1137
    %v1278 = vmul.f32 %v163, %v1137
    %v1279 = vmul.f32 %v164, %v1137
    %v1280 = vmul.f32 %v165, %v1137
    %v1281 = vmul.f32 %v166, %v1137
    %v1282 = vmul.f32 %v167, %v1137
    %v1283 = vmul.f32 %v168, %v1137
    %v1284 = vmul.f32 %v169, %v1142
    %v1285 = vmul.f32 %v170, %v1142
    %v1286 = vmul.f32 %v171, %v1142
    %v1287 = vmul.f32 %v172, %v1142
    %v1288 = vmul.f32 %v173, %v1142
    %v1289 = vmul.f32 %v174, %v1142
    %v1290 = vmul.f32 %v175, %v1142
    %1292 = vset.pattern.permute.xlu0 0
    %1293 = vperm.xlu0 %1292, %v1018
    %v1294 = vpop.permute.xlu0 %1293
    %1297 = vset.pattern.permute.xlu0 0
    %1298 = vperm.xlu0 %1297, %v1019
    %v1299 = vpop.permute.xlu0 %1298
    %1302 = vset.pattern.permute.xlu0 0
    %1303 = vperm.xlu0 %1302, %v1020
    %v1304 = vpop.permute.xlu0 %1303
    %1307 = vset.pattern.permute.xlu0 0
    %1308 = vperm.xlu0 %1307, %v1021
    %v1309 = vpop.permute.xlu0 %1308
    %1312 = vset.pattern.permute.xlu0 0
    %1313 = vperm.xlu0 %1312, %v1022
    %v1314 = vpop.permute.xlu0 %1313
    %1317 = vset.pattern.permute.xlu0 0
    %1318 = vperm.xlu0 %1317, %v1023
    %v1319 = vpop.permute.xlu0 %1318
    %1322 = vset.pattern.permute.xlu0 0
    %1323 = vperm.xlu0 %1322, %v1024
    %v1324 = vpop.permute.xlu0 %1323
    %1327 = vset.pattern.permute.xlu0 0
    %1328 = vperm.xlu0 %1327, %v1025
    %v1329 = vpop.permute.xlu0 %1328
    %1332 = vset.pattern.permute.xlu0 0
    %1333 = vperm.xlu0 %1332, %v1026
    %v1334 = vpop.permute.xlu0 %1333
    %1337 = vset.pattern.permute.xlu0 0
    %1338 = vperm.xlu0 %1337, %v1027
    %v1339 = vpop.permute.xlu0 %1338
    %1342 = vset.pattern.permute.xlu0 0
    %1343 = vperm.xlu0 %1342, %v1028
    %v1344 = vpop.permute.xlu0 %1343
    %1347 = vset.pattern.permute.xlu0 0
    %1348 = vperm.xlu0 %1347, %v1029
    %v1349 = vpop.permute.xlu0 %1348
    %1352 = vset.pattern.permute.xlu0 0
    %1353 = vperm.xlu0 %1352, %v1030
    %v1354 = vpop.permute.xlu0 %1353
    %1357 = vset.pattern.permute.xlu0 0
    %1358 = vperm.xlu0 %1357, %v1031
    %v1359 = vpop.permute.xlu0 %1358
    %1362 = vset.pattern.permute.xlu0 0
    %1363 = vperm.xlu0 %1362, %v1032
    %v1364 = vpop.permute.xlu0 %1363
    %1367 = vset.pattern.permute.xlu0 0
    %1368 = vperm.xlu0 %1367, %v1033
    %v1369 = vpop.permute.xlu0 %1368
    %1372 = vset.pattern.permute.xlu0 0
    %1373 = vperm.xlu0 %1372, %v1034
    %v1374 = vpop.permute.xlu0 %1373
    %1377 = vset.pattern.permute.xlu0 0
    %1378 = vperm.xlu0 %1377, %v1035
    %v1379 = vpop.permute.xlu0 %1378
    %1382 = vset.pattern.permute.xlu0 0
    %1383 = vperm.xlu0 %1382, %v1036
    %v1384 = vpop.permute.xlu0 %1383
    %1387 = vset.pattern.permute.xlu0 0
    %1388 = vperm.xlu0 %1387, %v1037
    %v1389 = vpop.permute.xlu0 %1388
    %1392 = vset.pattern.permute.xlu0 0
    %1393 = vperm.xlu0 %1392, %v1038
    %v1394 = vpop.permute.xlu0 %1393
    %v1396 = vadd.f32 %v1144, %v1294
    %v1397 = vadd.f32 %v1145, %v1294
    %v1398 = vadd.f32 %v1146, %v1294
    %v1399 = vadd.f32 %v1147, %v1294
    %v1400 = vadd.f32 %v1148, %v1294
    %v1401 = vadd.f32 %v1149, %v1294
    %v1402 = vadd.f32 %v1150, %v1294
    %v1403 = vadd.f32 %v1151, %v1299
    %v1404 = vadd.f32 %v1152, %v1299
    %v1405 = vadd.f32 %v1153, %v1299
    %v1406 = vadd.f32 %v1154, %v1299
    %v1407 = vadd.f32 %v1155, %v1299
    %v1408 = vadd.f32 %v1156, %v1299
    %v1409 = vadd.f32 %v1157, %v1299
    %v1410 = vadd.f32 %v1158, %v1304
    %v1411 = vadd.f32 %v1159, %v1304
    %v1412 = vadd.f32 %v1160, %v1304
    %v1413 = vadd.f32 %v1161, %v1304
    %v1414 = vadd.f32 %v1162, %v1304
    %v1415 = vadd.f32 %v1163, %v1304
    %v1416 = vadd.f32 %v1164, %v1304
    %v1417 = vadd.f32 %v1165, %v1309
    %v1418 = vadd.f32 %v1166, %v1309
    %v1419 = vadd.f32 %v1167, %v1309
    %v1420 = vadd.f32 %v1168, %v1309
    %v1421 = vadd.f32 %v1169, %v1309
    %v1422 = vadd.f32 %v1170, %v1309
    %v1423 = vadd.f32 %v1171, %v1309
    %v1424 = vadd.f32 %v1172, %v1314
    %v1425 = vadd.f32 %v1173, %v1314
    %v1426 = vadd.f32 %v1174, %v1314
    %v1427 = vadd.f32 %v1175, %v1314
    %v1428 = vadd.f32 %v1176, %v1314
    %v1429 = vadd.f32 %v1177, %v1314
    %v1430 = vadd.f32 %v1178, %v1314
    %v1431 = vadd.f32 %v1179, %v1319
    %v1432 = vadd.f32 %v1180, %v1319
    %v1433 = vadd.f32 %v1181, %v1319
    %v1434 = vadd.f32 %v1182, %v1319
    %v1435 = vadd.f32 %v1183, %v1319
    %v1436 = vadd.f32 %v1184, %v1319
    %v1437 = vadd.f32 %v1185, %v1319
    %v1438 = vadd.f32 %v1186, %v1324
    %v1439 = vadd.f32 %v1187, %v1324
    %v1440 = vadd.f32 %v1188, %v1324
    %v1441 = vadd.f32 %v1189, %v1324
    %v1442 = vadd.f32 %v1190, %v1324
    %v1443 = vadd.f32 %v1191, %v1324
    %v1444 = vadd.f32 %v1192, %v1324
    %v1445 = vadd.f32 %v1193, %v1329
    %v1446 = vadd.f32 %v1194, %v1329
    %v1447 = vadd.f32 %v1195, %v1329
    %v1448 = vadd.f32 %v1196, %v1329
    %v1449 = vadd.f32 %v1197, %v1329
    %v1450 = vadd.f32 %v1198, %v1329
    %v1451 = vadd.f32 %v1199, %v1329
    %v1452 = vadd.f32 %v1200, %v1334
    %v1453 = vadd.f32 %v1201, %v1334
    %v1454 = vadd.f32 %v1202, %v1334
    %v1455 = vadd.f32 %v1203, %v1334
    %v1456 = vadd.f32 %v1204, %v1334
    %v1457 = vadd.f32 %v1205, %v1334
    %v1458 = vadd.f32 %v1206, %v1334
    %v1459 = vadd.f32 %v1207, %v1339
    %v1460 = vadd.f32 %v1208, %v1339
    %v1461 = vadd.f32 %v1209, %v1339
    %v1462 = vadd.f32 %v1210, %v1339
    %v1463 = vadd.f32 %v1211, %v1339
    %v1464 = vadd.f32 %v1212, %v1339
    %v1465 = vadd.f32 %v1213, %v1339
    %v1466 = vadd.f32 %v1214, %v1344
    %v1467 = vadd.f32 %v1215, %v1344
    %v1468 = vadd.f32 %v1216, %v1344
    %v1469 = vadd.f32 %v1217, %v1344
    %v1470 = vadd.f32 %v1218, %v1344
    %v1471 = vadd.f32 %v1219, %v1344
    %v1472 = vadd.f32 %v1220, %v1344
    %v1473 = vadd.f32 %v1221, %v1349
    %v1474 = vadd.f32 %v1222, %v1349
    %v1475 = vadd.f32 %v1223, %v1349
    %v1476 = vadd.f32 %v1224, %v1349
    %v1477 = vadd.f32 %v1225, %v1349
    %v1478 = vadd.f32 %v1226, %v1349
    %v1479 = vadd.f32 %v1227, %v1349
    %v1480 = vadd.f32 %v1228, %v1354
    %v1481 = vadd.f32 %v1229, %v1354
    %v1482 = vadd.f32 %v1230, %v1354
    %v1483 = vadd.f32 %v1231, %v1354
    %v1484 = vadd.f32 %v1232, %v1354
    %v1485 = vadd.f32 %v1233, %v1354
    %v1486 = vadd.f32 %v1234, %v1354
    %v1487 = vadd.f32 %v1235, %v1359
    %v1488 = vadd.f32 %v1236, %v1359
    %v1489 = vadd.f32 %v1237, %v1359
    %v1490 = vadd.f32 %v1238, %v1359
    %v1491 = vadd.f32 %v1239, %v1359
    %v1492 = vadd.f32 %v1240, %v1359
    %v1493 = vadd.f32 %v1241, %v1359
    %v1494 = vadd.f32 %v1242, %v1364
    %v1495 = vadd.f32 %v1243, %v1364
    %v1496 = vadd.f32 %v1244, %v1364
    %v1497 = vadd.f32 %v1245, %v1364
    %v1498 = vadd.f32 %v1246, %v1364
    %v1499 = vadd.f32 %v1247, %v1364
    %v1500 = vadd.f32 %v1248, %v1364
    %v1501 = vadd.f32 %v1249, %v1369
    %v1502 = vadd.f32 %v1250, %v1369
    %v1503 = vadd.f32 %v1251, %v1369
    %v1504 = vadd.f32 %v1252, %v1369
    %v1505 = vadd.f32 %v1253, %v1369
    %v1506 = vadd.f32 %v1254, %v1369
    %v1507 = vadd.f32 %v1255, %v1369
    %v1508 = vadd.f32 %v1256, %v1374
    %v1509 = vadd.f32 %v1257, %v1374
    %v1510 = vadd.f32 %v1258, %v1374
    %v1511 = vadd.f32 %v1259, %v1374
    %v1512 = vadd.f32 %v1260, %v1374
    %v1513 = vadd.f32 %v1261, %v1374
    %v1514 = vadd.f32 %v1262, %v1374
    %v1515 = vadd.f32 %v1263, %v1379
    %v1516 = vadd.f32 %v1264, %v1379
    %v1517 = vadd.f32 %v1265, %v1379
    %v1518 = vadd.f32 %v1266, %v1379
    %v1519 = vadd.f32 %v1267, %v1379
    %v1520 = vadd.f32 %v1268, %v1379
    %v1521 = vadd.f32 %v1269, %v1379
    %v1522 = vadd.f32 %v1270, %v1384
    %v1523 = vadd.f32 %v1271, %v1384
    %v1524 = vadd.f32 %v1272, %v1384
    %v1525 = vadd.f32 %v1273, %v1384
    %v1526 = vadd.f32 %v1274, %v1384
    %v1527 = vadd.f32 %v1275, %v1384
    %v1528 = vadd.f32 %v1276, %v1384
    %v1529 = vadd.f32 %v1277, %v1389
    %v1530 = vadd.f32 %v1278, %v1389
    %v1531 = vadd.f32 %v1279, %v1389
    %v1532 = vadd.f32 %v1280, %v1389
    %v1533 = vadd.f32 %v1281, %v1389
    %v1534 = vadd.f32 %v1282, %v1389
    %v1535 = vadd.f32 %v1283, %v1389
    %v1536 = vadd.f32 %v1284, %v1394
    %v1537 = vadd.f32 %v1285, %v1394
    %v1538 = vadd.f32 %v1286, %v1394
    %v1539 = vadd.f32 %v1287, %v1394
    %v1540 = vadd.f32 %v1288, %v1394
    %v1541 = vadd.f32 %v1289, %v1394
    %v1542 = vadd.f32 %v1290, %v1394
    %v1543 = vmax.f32 %v1396, 0.0
    %v1544 = vmax.f32 %v1397, 0.0
    %v1545 = vmax.f32 %v1398, 0.0
    %v1546 = vmax.f32 %v1399, 0.0
    %v1547 = vmax.f32 %v1400, 0.0
    %v1548 = vmax.f32 %v1401, 0.0
    %v1549 = vmax.f32 %v1402, 0.0
    %v1550 = vmax.f32 %v1403, 0.0
    %v1551 = vmax.f32 %v1404, 0.0
    %v1552 = vmax.f32 %v1405, 0.0
    %v1553 = vmax.f32 %v1406, 0.0
    %v1554 = vmax.f32 %v1407, 0.0
    %v1555 = vmax.f32 %v1408, 0.0
    %v1556 = vmax.f32 %v1409, 0.0
    %v1557 = vmax.f32 %v1410, 0.0
    %v1558 = vmax.f32 %v1411, 0.0
    %v1559 = vmax.f32 %v1412, 0.0
    %v1560 = vmax.f32 %v1413, 0.0
    %v1561 = vmax.f32 %v1414, 0.0
    %v1562 = vmax.f32 %v1415, 0.0
    %v1563 = vmax.f32 %v1416, 0.0
    %v1564 = vmax.f32 %v1417, 0.0
    %v1565 = vmax.f32 %v1418, 0.0
    %v1566 = vmax.f32 %v1419, 0.0
    %v1567 = vmax.f32 %v1420, 0.0
    %v1568 = vmax.f32 %v1421, 0.0
    %v1569 = vmax.f32 %v1422, 0.0
    %v1570 = vmax.f32 %v1423, 0.0
    %v1571 = vmax.f32 %v1424, 0.0
    %v1572 = vmax.f32 %v1425, 0.0
    %v1573 = vmax.f32 %v1426, 0.0
    %v1574 = vmax.f32 %v1427, 0.0
    %v1575 = vmax.f32 %v1428, 0.0
    %v1576 = vmax.f32 %v1429, 0.0
    %v1577 = vmax.f32 %v1430, 0.0
    %v1578 = vmax.f32 %v1431, 0.0
    %v1579 = vmax.f32 %v1432, 0.0
    %v1580 = vmax.f32 %v1433, 0.0
    %v1581 = vmax.f32 %v1434, 0.0
    %v1582 = vmax.f32 %v1435, 0.0
    %v1583 = vmax.f32 %v1436, 0.0
    %v1584 = vmax.f32 %v1437, 0.0
    %v1585 = vmax.f32 %v1438, 0.0
    %v1586 = vmax.f32 %v1439, 0.0
    %v1587 = vmax.f32 %v1440, 0.0
    %v1588 = vmax.f32 %v1441, 0.0
    %v1589 = vmax.f32 %v1442, 0.0
    %v1590 = vmax.f32 %v1443, 0.0
    %v1591 = vmax.f32 %v1444, 0.0
    %v1592 = vmax.f32 %v1445, 0.0
    %v1593 = vmax.f32 %v1446, 0.0
    %v1594 = vmax.f32 %v1447, 0.0
    %v1595 = vmax.f32 %v1448, 0.0
    %v1596 = vmax.f32 %v1449, 0.0
    %v1597 = vmax.f32 %v1450, 0.0
    %v1598 = vmax.f32 %v1451, 0.0
    %v1599 = vmax.f32 %v1452, 0.0
    %v1600 = vmax.f32 %v1453, 0.0
    %v1601 = vmax.f32 %v1454, 0.0
    %v1602 = vmax.f32 %v1455, 0.0
    %v1603 = vmax.f32 %v1456, 0.0
    %v1604 = vmax.f32 %v1457, 0.0
    %v1605 = vmax.f32 %v1458, 0.0
    %v1606 = vmax.f32 %v1459, 0.0
    %v1607 = vmax.f32 %v1460, 0.0
    %v1608 = vmax.f32 %v1461, 0.0
    %v1609 = vmax.f32 %v1462, 0.0
    %v1610 = vmax.f32 %v1463, 0.0
    %v1611 = vmax.f32 %v1464, 0.0
    %v1612 = vmax.f32 %v1465, 0.0
    %v1613 = vmax.f32 %v1466, 0.0
    %v1614 = vmax.f32 %v1467, 0.0
    %v1615 = vmax.f32 %v1468, 0.0
    %v1616 = vmax.f32 %v1469, 0.0
    %v1617 = vmax.f32 %v1470, 0.0
    %v1618 = vmax.f32 %v1471, 0.0
    %v1619 = vmax.f32 %v1472, 0.0
    %v1620 = vmax.f32 %v1473, 0.0
    %v1621 = vmax.f32 %v1474, 0.0
    %v1622 = vmax.f32 %v1475, 0.0
    %v1623 = vmax.f32 %v1476, 0.0
    %v1624 = vmax.f32 %v1477, 0.0
    %v1625 = vmax.f32 %v1478, 0.0
    %v1626 = vmax.f32 %v1479, 0.0
    %v1627 = vmax.f32 %v1480, 0.0
    %v1628 = vmax.f32 %v1481, 0.0
    %v1629 = vmax.f32 %v1482, 0.0
    %v1630 = vmax.f32 %v1483, 0.0
    %v1631 = vmax.f32 %v1484, 0.0
    %v1632 = vmax.f32 %v1485, 0.0
    %v1633 = vmax.f32 %v1486, 0.0
    %v1634 = vmax.f32 %v1487, 0.0
    %v1635 = vmax.f32 %v1488, 0.0
    %v1636 = vmax.f32 %v1489, 0.0
    %v1637 = vmax.f32 %v1490, 0.0
    %v1638 = vmax.f32 %v1491, 0.0
    %v1639 = vmax.f32 %v1492, 0.0
    %v1640 = vmax.f32 %v1493, 0.0
    %v1641 = vmax.f32 %v1494, 0.0
    %v1642 = vmax.f32 %v1495, 0.0
    %v1643 = vmax.f32 %v1496, 0.0
    %v1644 = vmax.f32 %v1497, 0.0
    %v1645 = vmax.f32 %v1498, 0.0
    %v1646 = vmax.f32 %v1499, 0.0
    %v1647 = vmax.f32 %v1500, 0.0
    %v1648 = vmax.f32 %v1501, 0.0
    %v1649 = vmax.f32 %v1502, 0.0
    %v1650 = vmax.f32 %v1503, 0.0
    %v1651 = vmax.f32 %v1504, 0.0
    %v1652 = vmax.f32 %v1505, 0.0
    %v1653 = vmax.f32 %v1506, 0.0
    %v1654 = vmax.f32 %v1507, 0.0
    %v1655 = vmax.f32 %v1508, 0.0
    %v1656 = vmax.f32 %v1509, 0.0
    %v1657 = vmax.f32 %v1510, 0.0
    %v1658 = vmax.f32 %v1511, 0.0
    %v1659 = vmax.f32 %v1512, 0.0
    %v1660 = vmax.f32 %v1513, 0.0
    %v1661 = vmax.f32 %v1514, 0.0
    %v1662 = vmax.f32 %v1515, 0.0
    %v1663 = vmax.f32 %v1516, 0.0
    %v1664 = vmax.f32 %v1517, 0.0
    %v1665 = vmax.f32 %v1518, 0.0
    %v1666 = vmax.f32 %v1519, 0.0
    %v1667 = vmax.f32 %v1520, 0.0
    %v1668 = vmax.f32 %v1521, 0.0
    %v1669 = vmax.f32 %v1522, 0.0
    %v1670 = vmax.f32 %v1523, 0.0
    %v1671 = vmax.f32 %v1524, 0.0
    %v1672 = vmax.f32 %v1525, 0.0
    %v1673 = vmax.f32 %v1526, 0.0
    %v1674 = vmax.f32 %v1527, 0.0
    %v1675 = vmax.f32 %v1528, 0.0
    %v1676 = vmax.f32 %v1529, 0.0
    %v1677 = vmax.f32 %v1530, 0.0
    %v1678 = vmax.f32 %v1531, 0.0
    %v1679 = vmax.f32 %v1532, 0.0
    %v1680 = vmax.f32 %v1533, 0.0
    %v1681 = vmax.f32 %v1534, 0.0
    %v1682 = vmax.f32 %v1535, 0.0
    %v1683 = vmax.f32 %v1536, 0.0
    %v1684 = vmax.f32 %v1537, 0.0
    %v1685 = vmax.f32 %v1538, 0.0
    %v1686 = vmax.f32 %v1539, 0.0
    %v1687 = vmax.f32 %v1540, 0.0
    %v1688 = vmax.f32 %v1541, 0.0
    %v1689 = vmax.f32 %v1542, 0.0
    %1690 = vst [vmem:[#allocation5] sm:$0xff] %v1543
    %1691 = vst [vmem:[#allocation5 + $0x8] sm:$0xff] %v1544
    %1692 = vst [vmem:[#allocation5 + $0x10] sm:$0xff] %v1545
    %1693 = vst [vmem:[#allocation5 + $0x18] sm:$0xff] %v1546
    %1694 = vst [vmem:[#allocation5 + $0x20] sm:$0xff] %v1547
    %1695 = vst [vmem:[#allocation5 + $0x28] sm:$0xff] %v1548
    %1696 = vst.msk [vmem:[#allocation5 + $0x30] sm:$0xff] %vm181, %v1549
    %1697 = vst [vmem:[#allocation5 + $0x38] sm:$0xff] %v1550
    %1698 = vst [vmem:[#allocation5 + $0x40] sm:$0xff] %v1551
    %1699 = vst [vmem:[#allocation5 + $0x48] sm:$0xff] %v1552
    %1700 = vst [vmem:[#allocation5 + $0x50] sm:$0xff] %v1553
    %1701 = vst [vmem:[#allocation5 + $0x58] sm:$0xff] %v1554
    %1702 = vst [vmem:[#allocation5 + $0x60] sm:$0xff] %v1555
    %1703 = vst.msk [vmem:[#allocation5 + $0x68] sm:$0xff] %vm181, %v1556
    %1704 = vst [vmem:[#allocation5 + $0x70] sm:$0xff] %v1557
    %1705 = vst [vmem:[#allocation5 + $0x78] sm:$0xff] %v1558
    %1706 = vst [vmem:[#allocation5 + $0x80] sm:$0xff] %v1559
    %1707 = vst [vmem:[#allocation5 + $0x88] sm:$0xff] %v1560
    %1708 = vst [vmem:[#allocation5 + $0x90] sm:$0xff] %v1561
    %1709 = vst [vmem:[#allocation5 + $0x98] sm:$0xff] %v1562
    %1710 = vst.msk [vmem:[#allocation5 + $0xa0] sm:$0xff] %vm181, %v1563
    %1711 = vst [vmem:[#allocation5 + $0xa8] sm:$0xff] %v1564
    %1712 = vst [vmem:[#allocation5 + $0xb0] sm:$0xff] %v1565
    %1713 = vst [vmem:[#allocation5 + $0xb8] sm:$0xff] %v1566
    %1714 = vst [vmem:[#allocation5 + $0xc0] sm:$0xff] %v1567
    %1715 = vst [vmem:[#allocation5 + $0xc8] sm:$0xff] %v1568
    %1716 = vst [vmem:[#allocation5 + $0xd0] sm:$0xff] %v1569
    %1717 = vst.msk [vmem:[#allocation5 + $0xd8] sm:$0xff] %vm181, %v1570
    %1718 = vst [vmem:[#allocation5 + $0xe0] sm:$0xff] %v1571
    %1719 = vst [vmem:[#allocation5 + $0xe8] sm:$0xff] %v1572
    %1720 = vst [vmem:[#allocation5 + $0xf0] sm:$0xff] %v1573
    %1721 = vst [vmem:[#allocation5 + $0xf8] sm:$0xff] %v1574
    %1722 = vst [vmem:[#allocation5 + $0x100] sm:$0xff] %v1575
    %1723 = vst [vmem:[#allocation5 + $0x108] sm:$0xff] %v1576
    %1724 = vst.msk [vmem:[#allocation5 + $0x110] sm:$0xff] %vm181, %v1577
    %1725 = vst [vmem:[#allocation5 + $0x118] sm:$0xff] %v1578
    %1726 = vst [vmem:[#allocation5 + $0x120] sm:$0xff] %v1579
    %1727 = vst [vmem:[#allocation5 + $0x128] sm:$0xff] %v1580
    %1728 = vst [vmem:[#allocation5 + $0x130] sm:$0xff] %v1581
    %1729 = vst [vmem:[#allocation5 + $0x138] sm:$0xff] %v1582
    %1730 = vst [vmem:[#allocation5 + $0x140] sm:$0xff] %v1583
    %1731 = vst.msk [vmem:[#allocation5 + $0x148] sm:$0xff] %vm181, %v1584
    %1732 = vst [vmem:[#allocation5 + $0x150] sm:$0xff] %v1585
    %1733 = vst [vmem:[#allocation5 + $0x158] sm:$0xff] %v1586
    %1734 = vst [vmem:[#allocation5 + $0x160] sm:$0xff] %v1587
    %1735 = vst [vmem:[#allocation5 + $0x168] sm:$0xff] %v1588
    %1736 = vst [vmem:[#allocation5 + $0x170] sm:$0xff] %v1589
    %1737 = vst [vmem:[#allocation5 + $0x178] sm:$0xff] %v1590
    %1738 = vst.msk [vmem:[#allocation5 + $0x180] sm:$0xff] %vm181, %v1591
    %1739 = vst [vmem:[#allocation5 + $0x188] sm:$0xff] %v1592
    %1740 = vst [vmem:[#allocation5 + $0x190] sm:$0xff] %v1593
    %1741 = vst [vmem:[#allocation5 + $0x198] sm:$0xff] %v1594
    %1742 = vst [vmem:[#allocation5 + $0x1a0] sm:$0xff] %v1595
    %1743 = vst [vmem:[#allocation5 + $0x1a8] sm:$0xff] %v1596
    %1744 = vst [vmem:[#allocation5 + $0x1b0] sm:$0xff] %v1597
    %1745 = vst.msk [vmem:[#allocation5 + $0x1b8] sm:$0xff] %vm181, %v1598
    %1746 = vst [vmem:[#allocation5 + $0x1c0] sm:$0xff] %v1599
    %1747 = vst [vmem:[#allocation5 + $0x1c8] sm:$0xff] %v1600
    %1748 = vst [vmem:[#allocation5 + $0x1d0] sm:$0xff] %v1601
    %1749 = vst [vmem:[#allocation5 + $0x1d8] sm:$0xff] %v1602
    %1750 = vst [vmem:[#allocation5 + $0x1e0] sm:$0xff] %v1603
    %1751 = vst [vmem:[#allocation5 + $0x1e8] sm:$0xff] %v1604
    %1752 = vst.msk [vmem:[#allocation5 + $0x1f0] sm:$0xff] %vm181, %v1605
    %1753 = vst [vmem:[#allocation5 + $0x1f8] sm:$0xff] %v1606
    %1754 = vst [vmem:[#allocation5 + $0x200] sm:$0xff] %v1607
    %1755 = vst [vmem:[#allocation5 + $0x208] sm:$0xff] %v1608
    %1756 = vst [vmem:[#allocation5 + $0x210] sm:$0xff] %v1609
    %1757 = vst [vmem:[#allocation5 + $0x218] sm:$0xff] %v1610
    %1758 = vst [vmem:[#allocation5 + $0x220] sm:$0xff] %v1611
    %1759 = vst.msk [vmem:[#allocation5 + $0x228] sm:$0xff] %vm181, %v1612
    %1760 = vst [vmem:[#allocation5 + $0x230] sm:$0xff] %v1613
    %1761 = vst [vmem:[#allocation5 + $0x238] sm:$0xff] %v1614
    %1762 = vst [vmem:[#allocation5 + $0x240] sm:$0xff] %v1615
    %1763 = vst [vmem:[#allocation5 + $0x248] sm:$0xff] %v1616
    %1764 = vst [vmem:[#allocation5 + $0x250] sm:$0xff] %v1617
    %1765 = vst [vmem:[#allocation5 + $0x258] sm:$0xff] %v1618
    %1766 = vst.msk [vmem:[#allocation5 + $0x260] sm:$0xff] %vm181, %v1619
    %1767 = vst [vmem:[#allocation5 + $0x268] sm:$0xff] %v1620
    %1768 = vst [vmem:[#allocation5 + $0x270] sm:$0xff] %v1621
    %1769 = vst [vmem:[#allocation5 + $0x278] sm:$0xff] %v1622
    %1770 = vst [vmem:[#allocation5 + $0x280] sm:$0xff] %v1623
    %1771 = vst [vmem:[#allocation5 + $0x288] sm:$0xff] %v1624
    %1772 = vst [vmem:[#allocation5 + $0x290] sm:$0xff] %v1625
    %1773 = vst.msk [vmem:[#allocation5 + $0x298] sm:$0xff] %vm181, %v1626
    %1774 = vst [vmem:[#allocation5 + $0x2a0] sm:$0xff] %v1627
    %1775 = vst [vmem:[#allocation5 + $0x2a8] sm:$0xff] %v1628
    %1776 = vst [vmem:[#allocation5 + $0x2b0] sm:$0xff] %v1629
    %1777 = vst [vmem:[#allocation5 + $0x2b8] sm:$0xff] %v1630
    %1778 = vst [vmem:[#allocation5 + $0x2c0] sm:$0xff] %v1631
    %1779 = vst [vmem:[#allocation5 + $0x2c8] sm:$0xff] %v1632
    %1780 = vst.msk [vmem:[#allocation5 + $0x2d0] sm:$0xff] %vm181, %v1633
    %1781 = vst [vmem:[#allocation5 + $0x2d8] sm:$0xff] %v1634
    %1782 = vst [vmem:[#allocation5 + $0x2e0] sm:$0xff] %v1635
    %1783 = vst [vmem:[#allocation5 + $0x2e8] sm:$0xff] %v1636
    %1784 = vst [vmem:[#allocation5 + $0x2f0] sm:$0xff] %v1637
    %1785 = vst [vmem:[#allocation5 + $0x2f8] sm:$0xff] %v1638
    %1786 = vst [vmem:[#allocation5 + $0x300] sm:$0xff] %v1639
    %1787 = vst.msk [vmem:[#allocation5 + $0x308] sm:$0xff] %vm181, %v1640
    %1788 = vst [vmem:[#allocation5 + $0x310] sm:$0xff] %v1641
    %1789 = vst [vmem:[#allocation5 + $0x318] sm:$0xff] %v1642
    %1790 = vst [vmem:[#allocation5 + $0x320] sm:$0xff] %v1643
    %1791 = vst [vmem:[#allocation5 + $0x328] sm:$0xff] %v1644
    %1792 = vst [vmem:[#allocation5 + $0x330] sm:$0xff] %v1645
    %1793 = vst [vmem:[#allocation5 + $0x338] sm:$0xff] %v1646
    %1794 = vst.msk [vmem:[#allocation5 + $0x340] sm:$0xff] %vm181, %v1647
    %1795 = vst [vmem:[#allocation5 + $0x348] sm:$0xff] %v1648
    %1796 = vst [vmem:[#allocation5 + $0x350] sm:$0xff] %v1649
    %1797 = vst [vmem:[#allocation5 + $0x358] sm:$0xff] %v1650
    %1798 = vst [vmem:[#allocation5 + $0x360] sm:$0xff] %v1651
    %1799 = vst [vmem:[#allocation5 + $0x368] sm:$0xff] %v1652
    %1800 = vst [vmem:[#allocation5 + $0x370] sm:$0xff] %v1653
    %1801 = vst.msk [vmem:[#allocation5 + $0x378] sm:$0xff] %vm181, %v1654
    %1802 = vst [vmem:[#allocation5 + $0x380] sm:$0xff] %v1655
    %1803 = vst [vmem:[#allocation5 + $0x388] sm:$0xff] %v1656
    %1804 = vst [vmem:[#allocation5 + $0x390] sm:$0xff] %v1657
    %1805 = vst [vmem:[#allocation5 + $0x398] sm:$0xff] %v1658
    %1806 = vst [vmem:[#allocation5 + $0x3a0] sm:$0xff] %v1659
    %1807 = vst [vmem:[#allocation5 + $0x3a8] sm:$0xff] %v1660
    %1808 = vst.msk [vmem:[#allocation5 + $0x3b0] sm:$0xff] %vm181, %v1661
    %1809 = vst [vmem:[#allocation5 + $0x3b8] sm:$0xff] %v1662
    %1810 = vst [vmem:[#allocation5 + $0x3c0] sm:$0xff] %v1663
    %1811 = vst [vmem:[#allocation5 + $0x3c8] sm:$0xff] %v1664
    %1812 = vst [vmem:[#allocation5 + $0x3d0] sm:$0xff] %v1665
    %1813 = vst [vmem:[#allocation5 + $0x3d8] sm:$0xff] %v1666
    %1814 = vst [vmem:[#allocation5 + $0x3e0] sm:$0xff] %v1667
    %1815 = vst.msk [vmem:[#allocation5 + $0x3e8] sm:$0xff] %vm181, %v1668
    %1816 = vst [vmem:[#allocation5 + $0x3f0] sm:$0xff] %v1669
    %1817 = vst [vmem:[#allocation5 + $0x3f8] sm:$0xff] %v1670
    %1818 = vst [vmem:[#allocation5 + $0x400] sm:$0xff] %v1671
    %1819 = vst [vmem:[#allocation5 + $0x408] sm:$0xff] %v1672
    %1820 = vst [vmem:[#allocation5 + $0x410] sm:$0xff] %v1673
    %1821 = vst [vmem:[#allocation5 + $0x418] sm:$0xff] %v1674
    %1822 = vst.msk [vmem:[#allocation5 + $0x420] sm:$0xff] %vm181, %v1675
    %1823 = vst [vmem:[#allocation5 + $0x428] sm:$0xff] %v1676
    %1824 = vst [vmem:[#allocation5 + $0x430] sm:$0xff] %v1677
    %1825 = vst [vmem:[#allocation5 + $0x438] sm:$0xff] %v1678
    %1826 = vst [vmem:[#allocation5 + $0x440] sm:$0xff] %v1679
    %1827 = vst [vmem:[#allocation5 + $0x448] sm:$0xff] %v1680
    %1828 = vst [vmem:[#allocation5 + $0x450] sm:$0xff] %v1681
    %1829 = vst.msk [vmem:[#allocation5 + $0x458] sm:$0xff] %vm181, %v1682
    %1830 = vst [vmem:[#allocation5 + $0x460] sm:$0xff] %v1683
    %1831 = vst [vmem:[#allocation5 + $0x468] sm:$0xff] %v1684
    %1832 = vst [vmem:[#allocation5 + $0x470] sm:$0xff] %v1685
    %1833 = vst [vmem:[#allocation5 + $0x478] sm:$0xff] %v1686
    %1834 = vst [vmem:[#allocation5 + $0x480] sm:$0xff] %v1687
    %1835 = vst [vmem:[#allocation5 + $0x488] sm:$0xff] %v1688
    %1836 = vst.msk [vmem:[#allocation5 + $0x490] sm:$0xff] %vm181, %v1689
    // Predicated region
    $region18: #{tpu_custom_call.1} parent=1 // pred_check
      _
    $region19: #{tpu_custom_call.1} parent=1 // pred_check_branch
      %1838 = sbr.rel (0) target = $region21
    $region20: #{tpu_custom_call.1} parent=1 // pred_region
      %s1840 = ssub.s32 18816, 18816
      %1841 = vsyncadd [#allocation4], %s1840
      %s1842 = sshll.u32 [#allocation5], 4
      %s1843 = int_to_ptr.vmem [resolvable:$true] %s1842
      %1848 = dma.vmem_to_hbm [thread:$0]  %s1843, 18816, %s3, [#allocation4], 896, 896, 56
    $region21: #{tpu_custom_call.1} parent=1 // pred_fallthru
      _
    // Predicated region
    $region22: #{tpu_custom_call.1} parent=1 // pred_check
      _
    $region23: #{tpu_custom_call.1} parent=1 // pred_check_branch
      %1850 = sbr.rel (0) target = $region25
    $region24: #{tpu_custom_call.1} parent=1 // pred_region
      %1851 = dma.done [#allocation4], 18816
    $region25: #{tpu_custom_call.1} parent=1 // pred_fallthru
      _
    %1852 = vsyncpa [#allocation3], 1
    %1853 = vsyncpa [#allocation4], 1

</llo_original>
